<compile_context>
chip_gen: v7x
topology: tpu7x:2x2x1
jax: 0.10.0
libtpu: 0.0.40
codegen_flags: <defaults>
</compile_context>

<pallas_src>
import functools

import jax
import jax.numpy as jnp
from jax import lax
from jax.experimental import pallas as pl
from jax.experimental.pallas import tpu as pltpu

_NEG = -1e30        # finite "minus infinity" (avoids inf-inf -> NaN)
_EXP_CLIP = 80.0    # cap on exponents when re-basing column sums (assumes the
                    # within-tile sim dynamic range is < ~80 log-units, which
                    # holds for LightGlue-style descriptors; only padded
                    # columns, whose contribution is exactly 0, ever hit it)
_TINY = 1e-37


def _round_up(x, m):
    return (x + m - 1) // m * m


def _stats_kernel(desc0_ref, desc1_ref, wp_ref, bp_ref, lsz0_ref, lsz1_ref,
                  md0_ref, md1_ref, r_ref, c_ref,
                  colmax_scr, colsum_scr,
                  *, tm, m_valid, n_valid, mask_rows, mask_cols):
    """Sweep over M-tiles: projections + row stats (local) + online column LSE."""
    t = pl.program_id(1)
    num_t = pl.num_programs(1)

    wp = wp_ref[...]                          # (D, D), compute dtype, pre-scaled
    bp = bp_ref[...]                          # (1, D), f32, pre-scaled

    @pl.when(t == 0)
    def _init():
        # Project desc1 once per batch element; it stays resident in the output
        # block (constant block index along the M-tile axis) for the whole sweep.
        md1 = jnp.dot(desc1_ref[0], wp, preferred_element_type=jnp.float32) + bp
        md1_ref[0] = md1.astype(md1_ref.dtype)
        colmax_scr[...] = jnp.full(colmax_scr.shape, _NEG, jnp.float32)
        colsum_scr[...] = jnp.zeros(colsum_scr.shape, jnp.float32)

    # Project this desc0 tile (compute-dtype MXU inputs, f32 accumulation).
    md0 = jnp.dot(desc0_ref[0], wp, preferred_element_type=jnp.float32) + bp
    md0_c = md0.astype(md0_ref.dtype)
    md0_ref[0] = md0_c

    # Similarity tile: contract the feature dim directly (no explicit .T).
    sim = lax.dot_general(md0_c, md1_ref[0],
                          dimension_numbers=(((1,), (1,)), ((), ())),
                          preferred_element_type=jnp.float32)                   # (tm, Np)

    # Mask padded columns out of the row statistics.
    if mask_cols:
        col_ok = lax.broadcasted_iota(jnp.int32, (1, sim.shape[1]), 1) < n_valid
        sim_r = jnp.where(col_ok, sim, _NEG)
    else:
        sim_r = sim

    # Row log-softmax stats (local to the tile) -> r = logsigmoid(z0) - row_lse.
    m2 = jnp.max(sim_r, axis=1, keepdims=True)                                  # (tm, 1)
    e2 = jnp.exp(sim_r - m2)                                                    # single full-tile exp
    row_lse = m2 + jnp.log(jnp.sum(e2, axis=1, keepdims=True))                  # (tm, 1)
    r_ref[0] = lsz0_ref[0] - row_lse

    # Column stats, reusing e2 (no second full-tile exp):
    #   sum_i exp(sim[i,j] - new_max) = (sum_i e2[i,j] * exp(m2[i] - g)) * exp(g - new_max)
    if mask_rows:
        row_ok = (lax.broadcasted_iota(jnp.int32, (tm, 1), 0) + t * tm) < m_valid
        e2c = jnp.where(row_ok, e2, 0.0)
        m2c = jnp.where(row_ok, m2, _NEG)
        sim_c = jnp.where(row_ok, sim_r, _NEG)
    else:
        e2c, m2c, sim_c = e2, m2, sim_r

    g = jnp.max(m2c, axis=0, keepdims=True)                                     # (1, 1) tile reference
    p = jnp.exp(m2c - g)                                                        # (tm, 1), <= 1
    tile_sum = jnp.sum(e2c * p, axis=0, keepdims=True)                          # (1, Np), rel. to g
    tile_max = jnp.max(sim_c, axis=0, keepdims=True)                            # (1, Np)

    old_max = colmax_scr[...]
    new_max = jnp.maximum(old_max, tile_max)
    colsum_scr[...] = (colsum_scr[...] * jnp.exp(old_max - new_max)
                       + tile_sum * jnp.exp(jnp.minimum(g - new_max, _EXP_CLIP)))
    colmax_scr[...] = new_max

    @pl.when(t == num_t - 1)
    def _finalize():
        col_lse = colmax_scr[...] + jnp.log(jnp.maximum(colsum_scr[...], _TINY))
        c_ref[0] = lsz1_ref[0] - col_lse


def _scores_kernel(md0_ref, md1_ref, r_ref, c_ref, out_ref):
    """Sweep 2: out = 2*sim + r + c, written as a lane-dense (tm, Np) block."""
    sim = lax.dot_general(md0_ref[0], md1_ref[0],
                          dimension_numbers=(((1,), (1,)), ((), ())),
                          preferred_element_type=jnp.float32)                   # (tm, Np)
    out_ref[0] = (2.0 * sim + r_ref[0] + c_ref[0]).astype(out_ref.dtype)


def match_assignment(desc0, desc1, wp, bp, wm, bm, dim, *, tm=256,
                     compute_dtype=jnp.bfloat16):
    B, M, D = desc0.shape
    _, N, _ = desc1.shape
    scale = float(dim) ** 0.25

    # Fold the constant 1/scale into the projection weights once; pre-cast the
    # MXU operands to the compute dtype so the kernel streams fewer HBM bytes.
    wp_s = (wp.astype(jnp.float32) / scale).astype(compute_dtype)
    bp_s = (bp.astype(jnp.float32) / scale).reshape(1, D)

    # Matchability head (Linear(dim, 1) + logsigmoid): tiny D->1 reduction,
    # computed in XLA and fed to the kernels in (M,1) / (1,N) layouts.
    lsz0 = jax.nn.log_sigmoid(desc0 @ wm + bm)                                  # (B, M, 1)
    lsz1 = jnp.swapaxes(jax.nn.log_sigmoid(desc1 @ wm + bm), 1, 2)              # (B, 1, N)

    # Tile / pad sizes: tm multiple of 8 sublanes, N padded to 128 lanes
    # (lane-dense output stores).
    tm = _round_up(min(tm, _round_up(M, 8)), 8)
    m_pad = _round_up(M, tm)
    n_pad = _round_up(N, 128)
    n_tiles = m_pad // tm

    d0 = jnp.pad(desc0, ((0, 0), (0, m_pad - M), (0, 0))).astype(compute_dtype)
    d1 = jnp.pad(desc1, ((0, 0), (0, n_pad - N), (0, 0))).astype(compute_dtype)
    lsz0 = jnp.pad(lsz0, ((0, 0), (0, m_pad - M), (0, 0))).astype(jnp.float32)
    lsz1 = jnp.pad(lsz1, ((0, 0), (0, 0), (0, n_pad - N))).astype(jnp.float32)

    stats_kernel = functools.partial(
        _stats_kernel, tm=tm, m_valid=M, n_valid=N,
        mask_rows=(m_pad != M), mask_cols=(n_pad != N))

    md0p, md1p, r, c = pl.pallas_call(
        stats_kernel,
        out_shape=(
            jax.ShapeDtypeStruct((B, m_pad, D), compute_dtype),   # projected desc0
            jax.ShapeDtypeStruct((B, n_pad, D), compute_dtype),   # projected desc1
            jax.ShapeDtypeStruct((B, m_pad, 1), jnp.float32),     # r = lsz0 - row_lse
            jax.ShapeDtypeStruct((B, 1, n_pad), jnp.float32),     # c = lsz1 - col_lse
        ),
        grid_spec=pltpu.PrefetchScalarGridSpec(
            num_scalar_prefetch=0,
            grid=(B, n_tiles),
            in_specs=[
                pl.BlockSpec((1, tm, D), lambda b, t: (b, t, 0)),      # desc0 tile
                pl.BlockSpec((1, n_pad, D), lambda b, t: (b, 0, 0)),   # desc1 (whole)
                pl.BlockSpec((D, D), lambda b, t: (0, 0)),             # Wp / scale
                pl.BlockSpec((1, D), lambda b, t: (0, 0)),             # bp / scale
                pl.BlockSpec((1, tm, 1), lambda b, t: (b, t, 0)),      # logsigmoid(z0)
                pl.BlockSpec((1, 1, n_pad), lambda b, t: (b, 0, 0)),   # logsigmoid(z1)
            ],
            out_specs=(
                pl.BlockSpec((1, tm, D), lambda b, t: (b, t, 0)),
                pl.BlockSpec((1, n_pad, D), lambda b, t: (b, 0, 0)),
                pl.BlockSpec((1, tm, 1), lambda b, t: (b, t, 0)),
                pl.BlockSpec((1, 1, n_pad), lambda b, t: (b, 0, 0)),
            ),
            scratch_shapes=[
                pltpu.VMEM((1, n_pad), jnp.float32),    # running column max
                pltpu.VMEM((1, n_pad), jnp.float32),    # running column sum-exp
            ],
        ),
        compiler_params=pltpu.CompilerParams(
            dimension_semantics=("parallel", "arbitrary"),
            vmem_limit_bytes=48 * 1024 * 1024,
        ),
    )(d0, d1, wp_s, bp_s, lsz0, lsz1)

    scores = pl.pallas_call(
        _scores_kernel,
        out_shape=jax.ShapeDtypeStruct((B, m_pad, n_pad), jnp.float32),
        grid_spec=pltpu.PrefetchScalarGridSpec(
            num_scalar_prefetch=0,
            grid=(B, n_tiles),
            in_specs=[
                pl.BlockSpec((1, tm, D), lambda b, t: (b, t, 0)),
                pl.BlockSpec((1, n_pad, D), lambda b, t: (b, 0, 0)),
                pl.BlockSpec((1, tm, 1), lambda b, t: (b, t, 0)),
                pl.BlockSpec((1, 1, n_pad), lambda b, t: (b, 0, 0)),
            ],
            out_specs=pl.BlockSpec((1, tm, n_pad), lambda b, t: (b, t, 0)),
        ),
        compiler_params=pltpu.CompilerParams(
            dimension_semantics=("parallel", "parallel"),
            vmem_limit_bytes=48 * 1024 * 1024,
        ),
    )(md0p, md1p, r, c)

    return scores[:, :M, :N]


def match_assignment_ref(desc0, desc1, wp, bp, wm, bm, dim):
    """Pure-JAX reference mirroring the PyTorch forward (f32 everywhere)."""
    scale = float(dim) ** 0.25
    md0 = (desc0 @ wp + bp) / scale
    md1 = (desc1 @ wp + bp) / scale
    sim = jnp.einsum("bmd,bnd->bmn", md0, md1)
    z0 = desc0 @ wm + bm
    z1 = desc1 @ wm + bm
    cert = jax.nn.log_sigmoid(z0) + jnp.swapaxes(jax.nn.log_sigmoid(z1), 1, 2)
    scores0 = jax.nn.log_softmax(sim, axis=2)
    scores1 = jax.nn.log_softmax(sim, axis=1)
    return scores0 + scores1 + cert


if __name__ == "__main__":
    # Small shapes chosen to exercise M-tiling (2 tiles), row padding (40 -> 64)
    # and column padding (80 -> 128).
    B, M, N, D = 2, 40, 80, 32

    key = jax.random.PRNGKey(0)
    k0, k1, k2, k3, k4, k5 = jax.random.split(key, 6)

    desc0 = jax.random.normal(k0, (B, M, D), dtype=jnp.float32)
    desc1 = jax.random.normal(k1, (B, N, D), dtype=jnp.float32)

    # deterministic parameter init (Linear(dim, dim) and Linear(dim, 1))
    wp = jax.random.normal(k2, (D, D), dtype=jnp.float32) * (1.0 / D ** 0.5)
    bp = jax.random.normal(k3, (1, D), dtype=jnp.float32) * 0.1
    wm = jax.random.normal(k4, (D, 1), dtype=jnp.float32) * (1.0 / D ** 0.5)
    bm = jax.random.normal(k5, (1, 1), dtype=jnp.float32) * 0.1

    ref = match_assignment_ref(desc0, desc1, wp, bp, wm, bm, D)

    # Exact-arithmetic path (f32 MXU) -> tight check of the kernel logic.
    scores_f32 = match_assignment(desc0, desc1, wp, bp, wm, bm, D, tm=32,
                                  compute_dtype=jnp.float32)
    scores_f32 = jax.block_until_ready(scores_f32)
    assert scores_f32.shape == (B, M, N)
    assert jnp.allclose(scores_f32, ref, atol=1e-3, rtol=1e-4), "f32 path mismatch"

    # Default bf16 MXU path -> looser tolerance (bf16 inputs, f32 accumulate).
    scores_bf16 = match_assignment(desc0, desc1, wp, bp, wm, bm, D, tm=32)
    scores_bf16 = jax.block_until_ready(scores_bf16)
    assert scores_bf16.shape == (B, M, N)
    assert jnp.allclose(scores_bf16, ref, atol=2e-1, rtol=5e-2), "bf16 path mismatch"

    print("KERNEL_OK")
</pallas_src>

<mosaic_0001>
module attributes {stable_mosaic.version = 11 : i64} {
  func.func @_stats_kernel(%arg0: i32, %arg1: i32, %arg2: memref<1x32x32xf32, #tpu.memory_space<vmem>>, %arg3: memref<1x128x32xf32, #tpu.memory_space<vmem>>, %arg4: memref<32x32xf32, #tpu.memory_space<vmem>>, %arg5: memref<1x32xf32, #tpu.memory_space<vmem>>, %arg6: memref<1x32x1xf32, #tpu.memory_space<vmem>>, %arg7: memref<1x1x128xf32, #tpu.memory_space<vmem>>, %arg8: memref<1x32x32xf32, #tpu.memory_space<vmem>>, %arg9: memref<1x128x32xf32, #tpu.memory_space<vmem>>, %arg10: memref<1x32x1xf32, #tpu.memory_space<vmem>>, %arg11: memref<1x1x128xf32, #tpu.memory_space<vmem>>, %arg12: memref<1x128xf32, #tpu.memory_space<vmem>>, %arg13: memref<1x128xf32, #tpu.memory_space<vmem>>) attributes {dimension_semantics = [#tpu.dimension_semantics<parallel>, #tpu.dimension_semantics<arbitrary>], iteration_bounds = array<i64: 2, 2>, scalar_prefetch = 0 : i64, scratch_operands = 2 : i64, tpu.core_type = #tpu.core_type<tc>, window_params = [{transform_indices = @transform_0, window_bounds = array<i64: 1, 32, 32>}, {transform_indices = @transform_1, window_bounds = array<i64: 1, 128, 32>}, {pipeline_mode = #tpu.pipeline_mode<synchronous>, transform_indices = @transform_2, window_bounds = array<i64: 32, 32>}, {pipeline_mode = #tpu.pipeline_mode<synchronous>, transform_indices = @transform_3, window_bounds = array<i64: 1, 32>}, {transform_indices = @transform_4, window_bounds = array<i64: 1, 32, 1>}, {transform_indices = @transform_5, window_bounds = array<i64: 1, 1, 128>}, {transform_indices = @transform_6, window_bounds = array<i64: 1, 32, 32>}, {transform_indices = @transform_7, window_bounds = array<i64: 1, 128, 32>}, {transform_indices = @transform_8, window_bounds = array<i64: 1, 32, 1>}, {transform_indices = @transform_9, window_bounds = array<i64: 1, 1, 128>}]} {
    %c0 = arith.constant 0 : index
    %c0_0 = arith.constant 0 : index
    %0 = vector.load %arg4[%c0, %c0_0] : memref<32x32xf32, #tpu.memory_space<vmem>>, vector<32x32xf32>
    %c0_1 = arith.constant 0 : index
    %c0_2 = arith.constant 0 : index
    %1 = vector.load %arg5[%c0_1, %c0_2] : memref<1x32xf32, #tpu.memory_space<vmem>>, vector<1x32xf32>
    %c0_i32 = arith.constant 0 : i32
    %2 = arith.cmpi eq, %arg1, %c0_i32 : i32
    %3 = arith.extui %2 : i1 to i32
    %c0_i32_3 = arith.constant 0 : i32
    %4 = arith.cmpi ne, %3, %c0_i32_3 : i32
    scf.if %4 {
      %c0_39 = arith.constant 0 : index
      %c0_40 = arith.constant 0 : index
      %c0_41 = arith.constant 0 : index
      %83 = vector.load %arg3[%c0_39, %c0_40, %c0_41] : memref<1x128x32xf32, #tpu.memory_space<vmem>>, vector<1x128x32xf32>
      %84 = vector.shape_cast %83 : vector<1x128x32xf32> to vector<128x32xf32>
      %cst_42 = arith.constant dense<0.000000e+00> : vector<128x32xf32>
      %85 = tpu.matmul %84, %0, %cst_42 {dimension_numbers = #tpu.dot_dimension_numbers<[1], [0], [0], [1], [0, 0, 1, 1], [], []>} : vector<128x32xf32>, vector<32x32xf32>, vector<128x32xf32> -> vector<128x32xf32>
      %86 = vector.broadcast %1 : vector<1x32xf32> to vector<128x32xf32>
      %87 = arith.addf %85, %86 : vector<128x32xf32>
      %c0_43 = arith.constant 0 : index
      %c0_44 = arith.constant 0 : index
      %c0_45 = arith.constant 0 : index
      %88 = vector.load %arg9[%c0_43, %c0_44, %c0_45] : memref<1x128x32xf32, #tpu.memory_space<vmem>>, vector<1x128x32xf32>
      %89 = vector.shape_cast %88 : vector<1x128x32xf32> to vector<128x32xf32>
      %90 = vector.shape_cast %87 : vector<128x32xf32> to vector<1x128x32xf32>
      tpu.vector_store %arg9[%c0_43, %c0_44, %c0_45], %90 {strides = array<i32>} : memref<1x128x32xf32, #tpu.memory_space<vmem>>, vector<1x128x32xf32>,
      %cst_46 = arith.constant -1.000000e+30 : f32
      %91 = vector.broadcast %cst_46 : f32 to vector<1x128xf32>
      %c0_47 = arith.constant 0 : index
      %c0_48 = arith.constant 0 : index
      %92 = vector.load %arg12[%c0_47, %c0_48] : memref<1x128xf32, #tpu.memory_space<vmem>>, vector<1x128xf32>
      tpu.vector_store %arg12[%c0_47, %c0_48], %91 {strides = array<i32>} : memref<1x128xf32, #tpu.memory_space<vmem>>, vector<1x128xf32>,
      %cst_49 = arith.constant 0.000000e+00 : f32
      %93 = vector.broadcast %cst_49 : f32 to vector<1x128xf32>
      %c0_50 = arith.constant 0 : index
      %c0_51 = arith.constant 0 : index
      %94 = vector.load %arg13[%c0_50, %c0_51] : memref<1x128xf32, #tpu.memory_space<vmem>>, vector<1x128xf32>
      tpu.vector_store %arg13[%c0_50, %c0_51], %93 {strides = array<i32>} : memref<1x128xf32, #tpu.memory_space<vmem>>, vector<1x128xf32>,
    } else {
    }
    %c0_4 = arith.constant 0 : index
    %c0_5 = arith.constant 0 : index
    %c0_6 = arith.constant 0 : index
    %5 = vector.load %arg2[%c0_4, %c0_5, %c0_6] : memref<1x32x32xf32, #tpu.memory_space<vmem>>, vector<1x32x32xf32>
    %6 = vector.shape_cast %5 : vector<1x32x32xf32> to vector<32x32xf32>
    %cst = arith.constant dense<0.000000e+00> : vector<32x32xf32>
    %7 = tpu.matmul %6, %0, %cst {dimension_numbers = #tpu.dot_dimension_numbers<[1], [0], [0], [1], [0, 0, 1, 1], [], []>} : vector<32x32xf32>, vector<32x32xf32>, vector<32x32xf32> -> vector<32x32xf32>
    %8 = vector.broadcast %1 : vector<1x32xf32> to vector<32x32xf32>
    %9 = arith.addf %7, %8 : vector<32x32xf32>
    %c0_7 = arith.constant 0 : index
    %c0_8 = arith.constant 0 : index
    %c0_9 = arith.constant 0 : index
    %10 = vector.load %arg8[%c0_7, %c0_8, %c0_9] : memref<1x32x32xf32, #tpu.memory_space<vmem>>, vector<1x32x32xf32>
    %11 = vector.shape_cast %10 : vector<1x32x32xf32> to vector<32x32xf32>
    %12 = vector.shape_cast %9 : vector<32x32xf32> to vector<1x32x32xf32>
    tpu.vector_store %arg8[%c0_7, %c0_8, %c0_9], %12 {strides = array<i32>} : memref<1x32x32xf32, #tpu.memory_space<vmem>>, vector<1x32x32xf32>,
    %c0_10 = arith.constant 0 : index
    %c0_11 = arith.constant 0 : index
    %c0_12 = arith.constant 0 : index
    %13 = vector.load %arg9[%c0_10, %c0_11, %c0_12] : memref<1x128x32xf32, #tpu.memory_space<vmem>>, vector<1x128x32xf32>
    %14 = vector.shape_cast %13 : vector<1x128x32xf32> to vector<128x32xf32>
    %cst_13 = arith.constant dense<0.000000e+00> : vector<32x128xf32>
    %15 = tpu.matmul %9, %14, %cst_13 {dimension_numbers = #tpu.dot_dimension_numbers<[1], [1], [0], [0], [0, 0, 1, 0], [], []>} : vector<32x32xf32>, vector<128x32xf32>, vector<32x128xf32> -> vector<32x128xf32>
    %16 = tpu.iota {dimensions = array<i32: 1>} : vector<1x128xi32>
    %c80_i32 = arith.constant 80 : i32
    %17 = vector.broadcast %c80_i32 : i32 to vector<1x128xi32>
    %18 = arith.cmpi slt, %16, %17 : vector<1x128xi32>
    %cst_14 = arith.constant -1.000000e+30 : f32
    %19 = vector.shape_cast %18 : vector<1x128xi1> to vector<1x128xi1>
    %20 = vector.broadcast %19 : vector<1x128xi1> to vector<32x128xi1>
    %21 = vector.broadcast %cst_14 : f32 to vector<32x128xf32>
    %22 = arith.select %20, %15, %21 : vector<32x128xi1>, vector<32x128xf32>
    %cst_15 = arith.constant dense<0xFF800000> : vector<32xf32>
    %23 = vector.multi_reduction <maximumf>, %22, %cst_15 [1] : vector<32x128xf32> to vector<32xf32>
    %24 = vector.shape_cast %23 : vector<32xf32> to vector<32x1xf32>
    %25 = vector.broadcast %24 : vector<32x1xf32> to vector<32x128xf32>
    %26 = arith.subf %22, %25 : vector<32x128xf32>
    %27 = math.exp %26 : vector<32x128xf32>
    %cst_16 = arith.constant dense<0.000000e+00> : vector<32xf32>
    %28 = vector.multi_reduction <add>, %27, %cst_16 [1] : vector<32x128xf32> to vector<32xf32>
    %29 = vector.shape_cast %28 : vector<32xf32> to vector<32x1xf32>
    %30 = math.log %29 : vector<32x1xf32>
    %31 = arith.addf %24, %30 : vector<32x1xf32>
    %c0_17 = arith.constant 0 : index
    %c0_18 = arith.constant 0 : index
    %c0_19 = arith.constant 0 : index
    %32 = vector.load %arg6[%c0_17, %c0_18, %c0_19] : memref<1x32x1xf32, #tpu.memory_space<vmem>>, vector<1x32x1xf32>
    %33 = vector.shape_cast %32 : vector<1x32x1xf32> to vector<32x1xf32>
    %34 = arith.subf %33, %31 : vector<32x1xf32>
    %c0_20 = arith.constant 0 : index
    %c0_21 = arith.constant 0 : index
    %c0_22 = arith.constant 0 : index
    %35 = vector.load %arg10[%c0_20, %c0_21, %c0_22] : memref<1x32x1xf32, #tpu.memory_space<vmem>>, vector<1x32x1xf32>
    %36 = vector.shape_cast %35 : vector<1x32x1xf32> to vector<32x1xf32>
    %37 = vector.shape_cast %34 : vector<32x1xf32> to vector<1x32x1xf32>
    tpu.vector_store %arg10[%c0_20, %c0_21, %c0_22], %37 {strides = array<i32>} : memref<1x32x1xf32, #tpu.memory_space<vmem>>, vector<1x32x1xf32>,
    %38 = tpu.iota {dimensions = array<i32: 0>} : vector<32x1xi32>
    %c32_i32 = arith.constant 32 : i32
    %39 = arith.muli %arg1, %c32_i32 : i32
    %40 = vector.broadcast %39 : i32 to vector<32x1xi32>
    %41 = arith.addi %38, %40 : vector<32x1xi32>
    %c40_i32 = arith.constant 40 : i32
    %42 = vector.broadcast %c40_i32 : i32 to vector<32x1xi32>
    %43 = arith.cmpi slt, %41, %42 : vector<32x1xi32>
    %cst_23 = arith.constant 0.000000e+00 : f32
    %44 = vector.shape_cast %43 : vector<32x1xi1> to vector<32x1xi1>
    %45 = vector.broadcast %44 : vector<32x1xi1> to vector<32x128xi1>
    %46 = vector.broadcast %cst_23 : f32 to vector<32x128xf32>
    %47 = arith.select %45, %27, %46 : vector<32x128xi1>, vector<32x128xf32>
    %cst_24 = arith.constant -1.000000e+30 : f32
    %48 = vector.broadcast %cst_24 : f32 to vector<32x1xf32>
    %49 = arith.select %43, %24, %48 : vector<32x1xi1>, vector<32x1xf32>
    %cst_25 = arith.constant -1.000000e+30 : f32
    %50 = vector.shape_cast %43 : vector<32x1xi1> to vector<32x1xi1>
    %51 = vector.broadcast %50 : vector<32x1xi1> to vector<32x128xi1>
    %52 = vector.broadcast %cst_25 : f32 to vector<32x128xf32>
    %53 = arith.select %51, %22, %52 : vector<32x128xi1>, vector<32x128xf32>
    %cst_26 = arith.constant dense<0xFF800000> : vector<1xf32>
    %54 = vector.multi_reduction <maximumf>, %49, %cst_26 [0] : vector<32x1xf32> to vector<1xf32>
    %55 = vector.shape_cast %54 : vector<1xf32> to vector<1x1xf32>
    %56 = vector.broadcast %55 : vector<1x1xf32> to vector<32x1xf32>
    %57 = arith.subf %49, %56 : vector<32x1xf32>
    %58 = math.exp %57 : vector<32x1xf32>
    %59 = vector.broadcast %58 : vector<32x1xf32> to vector<32x128xf32>
    %60 = arith.mulf %47, %59 : vector<32x128xf32>
    %cst_27 = arith.constant dense<0.000000e+00> : vector<128xf32>
    %61 = vector.multi_reduction <add>, %60, %cst_27 [0] : vector<32x128xf32> to vector<128xf32>
    %62 = vector.shape_cast %61 : vector<128xf32> to vector<1x128xf32>
    %cst_28 = arith.constant dense<0xFF800000> : vector<128xf32>
    %63 = vector.multi_reduction <maximumf>, %53, %cst_28 [0] : vector<32x128xf32> to vector<128xf32>
    %64 = vector.shape_cast %63 : vector<128xf32> to vector<1x128xf32>
    %c0_29 = arith.constant 0 : index
    %c0_30 = arith.constant 0 : index
    %65 = vector.load %arg12[%c0_29, %c0_30] : memref<1x128xf32, #tpu.memory_space<vmem>>, vector<1x128xf32>
    %66 = arith.maximumf %65, %64 : vector<1x128xf32>
    %c0_31 = arith.constant 0 : index
    %c0_32 = arith.constant 0 : index
    %67 = vector.load %arg13[%c0_31, %c0_32] : memref<1x128xf32, #tpu.memory_space<vmem>>, vector<1x128xf32>
    %68 = arith.subf %65, %66 : vector<1x128xf32>
    %69 = math.exp %68 : vector<1x128xf32>
    %70 = arith.mulf %67, %69 : vector<1x128xf32>
    %71 = vector.broadcast %55 : vector<1x1xf32> to vector<1x128xf32>
    %72 = arith.subf %71, %66 : vector<1x128xf32>
    %cst_33 = arith.constant 8.000000e+01 : f32
    %73 = vector.broadcast %cst_33 : f32 to vector<1x128xf32>
    %74 = arith.minimumf %72, %73 : vector<1x128xf32>
    %75 = math.exp %74 : vector<1x128xf32>
    %76 = arith.mulf %62, %75 : vector<1x128xf32>
    %77 = arith.addf %70, %76 : vector<1x128xf32>
    %c0_34 = arith.constant 0 : index
    %c0_35 = arith.constant 0 : index
    %78 = vector.load %arg13[%c0_34, %c0_35] : memref<1x128xf32, #tpu.memory_space<vmem>>, vector<1x128xf32>
    tpu.vector_store %arg13[%c0_34, %c0_35], %77 {strides = array<i32>} : memref<1x128xf32, #tpu.memory_space<vmem>>, vector<1x128xf32>,
    %c0_36 = arith.constant 0 : index
    %c0_37 = arith.constant 0 : index
    %79 = vector.load %arg12[%c0_36, %c0_37] : memref<1x128xf32, #tpu.memory_space<vmem>>, vector<1x128xf32>
    tpu.vector_store %arg12[%c0_36, %c0_37], %66 {strides = array<i32>} : memref<1x128xf32, #tpu.memory_space<vmem>>, vector<1x128xf32>,
    %c1_i32 = arith.constant 1 : i32
    %80 = arith.cmpi eq, %arg1, %c1_i32 : i32
    %81 = arith.extui %80 : i1 to i32
    %c0_i32_38 = arith.constant 0 : i32
    %82 = arith.cmpi ne, %81, %c0_i32_38 : i32
    scf.if %82 {
      %c0_39 = arith.constant 0 : index
      %c0_40 = arith.constant 0 : index
      %83 = vector.load %arg12[%c0_39, %c0_40] : memref<1x128xf32, #tpu.memory_space<vmem>>, vector<1x128xf32>
      %c0_41 = arith.constant 0 : index
      %c0_42 = arith.constant 0 : index
      %84 = vector.load %arg13[%c0_41, %c0_42] : memref<1x128xf32, #tpu.memory_space<vmem>>, vector<1x128xf32>
      %cst_43 = arith.constant 9.99999991E-38 : f32
      %85 = vector.broadcast %cst_43 : f32 to vector<1x128xf32>
      %86 = arith.maximumf %84, %85 : vector<1x128xf32>
      %87 = math.log %86 : vector<1x128xf32>
      %88 = arith.addf %83, %87 : vector<1x128xf32>
      %c0_44 = arith.constant 0 : index
      %c0_45 = arith.constant 0 : index
      %c0_46 = arith.constant 0 : index
      %89 = vector.load %arg7[%c0_44, %c0_45, %c0_46] : memref<1x1x128xf32, #tpu.memory_space<vmem>>, vector<1x1x128xf32>
      %90 = vector.shape_cast %89 : vector<1x1x128xf32> to vector<1x128xf32>
      %91 = arith.subf %90, %88 : vector<1x128xf32>
      %c0_47 = arith.constant 0 : index
      %c0_48 = arith.constant 0 : index
      %c0_49 = arith.constant 0 : index
      %92 = vector.load %arg11[%c0_47, %c0_48, %c0_49] : memref<1x1x128xf32, #tpu.memory_space<vmem>>, vector<1x1x128xf32>
      %93 = vector.shape_cast %92 : vector<1x1x128xf32> to vector<1x128xf32>
      %94 = vector.shape_cast %91 : vector<1x128xf32> to vector<1x1x128xf32>
      tpu.vector_store %arg11[%c0_47, %c0_48, %c0_49], %94 {strides = array<i32>} : memref<1x1x128xf32, #tpu.memory_space<vmem>>, vector<1x1x128xf32>,
    } else {
    }
    return
  }
  func.func @transform_0(%arg0: i32, %arg1: i32) -> (i32, i32, i32) {
    %c0_i32 = arith.constant 0 : i32
    %c0_i32_0 = arith.constant 0 : i32
    return %arg0, %arg1, %c0_i32 : i32, i32, i32
  }
  func.func @transform_1(%arg0: i32, %arg1: i32) -> (i32, i32, i32) {
    %c0_i32 = arith.constant 0 : i32
    %c0_i32_0 = arith.constant 0 : i32
    %c0_i32_1 = arith.constant 0 : i32
    return %arg0, %c0_i32, %c0_i32_0 : i32, i32, i32
  }
  func.func @transform_2(%arg0: i32, %arg1: i32) -> (i32, i32) {
    %c0_i32 = arith.constant 0 : i32
    %c0_i32_0 = arith.constant 0 : i32
    %c0_i32_1 = arith.constant 0 : i32
    return %c0_i32, %c0_i32_0 : i32, i32
  }
  func.func @transform_3(%arg0: i32, %arg1: i32) -> (i32, i32) {
    %c0_i32 = arith.constant 0 : i32
    %c0_i32_0 = arith.constant 0 : i32
    %c0_i32_1 = arith.constant 0 : i32
    return %c0_i32, %c0_i32_0 : i32, i32
  }
  func.func @transform_4(%arg0: i32, %arg1: i32) -> (i32, i32, i32) {
    %c0_i32 = arith.constant 0 : i32
    %c0_i32_0 = arith.constant 0 : i32
    return %arg0, %arg1, %c0_i32 : i32, i32, i32
  }
  func.func @transform_5(%arg0: i32, %arg1: i32) -> (i32, i32, i32) {
    %c0_i32 = arith.constant 0 : i32
    %c0_i32_0 = arith.constant 0 : i32
    %c0_i32_1 = arith.constant 0 : i32
    return %arg0, %c0_i32, %c0_i32_0 : i32, i32, i32
  }
  func.func @transform_6(%arg0: i32, %arg1: i32) -> (i32, i32, i32) {
    %c0_i32 = arith.constant 0 : i32
    %c0_i32_0 = arith.constant 0 : i32
    return %arg0, %arg1, %c0_i32 : i32, i32, i32
  }
  func.func @transform_7(%arg0: i32, %arg1: i32) -> (i32, i32, i32) {
    %c0_i32 = arith.constant 0 : i32
    %c0_i32_0 = arith.constant 0 : i32
    %c0_i32_1 = arith.constant 0 : i32
    return %arg0, %c0_i32, %c0_i32_0 : i32, i32, i32
  }
  func.func @transform_8(%arg0: i32, %arg1: i32) -> (i32, i32, i32) {
    %c0_i32 = arith.constant 0 : i32
    %c0_i32_0 = arith.constant 0 : i32
    return %arg0, %arg1, %c0_i32 : i32, i32, i32
  }
  func.func @transform_9(%arg0: i32, %arg1: i32) -> (i32, i32, i32) {
    %c0_i32 = arith.constant 0 : i32
    %c0_i32_0 = arith.constant 0 : i32
    %c0_i32_1 = arith.constant 0 : i32
    return %arg0, %c0_i32, %c0_i32_0 : i32, i32, i32
  }
}

</mosaic_0001>

<llo_original>
// kernel: tpu_custom_call.1
$region0: #{tpu_custom_call.1}
  #allocation0 [shape = 'u32[]', space=smem, size = 0x4, offset = 0x4, fixed_abs, tag = 'smem constant byte address 0x4 - core index']
  #allocation1 [shape = 'u32[144,128]{1,0:T(1,128)}', space=vmem, size = 0x12000, scoped, tag = 'internal scratch']
  #allocation2 [shape = 'f32[1,128]{1,0:T(1,128)}', space=vmem, size = 0x200, scoped, tag = 'scratch operand']
  #allocation3 [shape = 'f32[1,128]{1,0:T(1,128)}', space=vmem, size = 0x200, scoped, tag = 'scratch operand']
  %s0 = inlined_call_operand.vmem [shape: f32[2,64,32], index: 0, kind: input, shape index: {}]
  %s1 = inlined_call_operand.vmem [shape: f32[2,128,32], index: 1, kind: input, shape index: {}]
  %s2 = inlined_call_operand.vmem [shape: f32[32,32], index: 2, kind: input, shape index: {}]
  %s3 = inlined_call_operand.vmem [shape: f32[1,32], index: 3, kind: input, shape index: {}]
  %s4 = inlined_call_operand.vmem [shape: f32[2,64,1], index: 4, kind: input, shape index: {}]
  %s5 = inlined_call_operand.vmem [shape: f32[2,1,128], index: 5, kind: input, shape index: {}]
  %s6 = inlined_call_operand.vmem [shape: f32[2,64,32], index: 6, kind: output, shape index: {0}]
  %s7 = inlined_call_operand.vmem [shape: f32[2,128,32], index: 7, kind: output, shape index: {1}]
  %s8 = inlined_call_operand.vmem [shape: f32[2,64,1], index: 8, kind: output, shape index: {2}]
  %s9 = inlined_call_operand.hbm [shape: f32[2,1,128], index: 9, kind: output, shape index: {3}]
  %10 = xla_tuple %s6, %s7, %s8, %s9
  %s11 = sld [smem:[#allocation0]]
  $region89: #{tpu_custom_call.1} parent=0
    _
  %s13 = ssub.s32 1, %s11
  %s14 = scalar_select 0, %s13, %s11
  $region1: #{tpu_custom_call.1} parent=0
    #allocation4 [shape = 'u8[1024]{0}', space=vmem, size = 0x400, scoped, tag = 'output window, operand 3']
    #allocation5 [shape = 's32[2]{0}', space=sflag, size = 0x8, scoped, tag = 'scoped memory for tpu_custom_call.1']
    %15 = vsyncpa [#allocation5], 0
    %s16 = scalar_lea.sflag [#allocation5], 1
    %17 = vsyncpa %s16, 0
    loop: start=0, step=1, limit=6
    $region2: #{tpu_custom_call.1} parent=1 // loop_pre_header
      _
    $region3: #{tpu_custom_call.1} parent=1 // loop_header
      %s19 = sphi 0, %s23
      %p20 = scmp.ge.s32.totalorder %s19, 6
      %s26 = sphi 0, %s38
      %s27 = sphi 0, %s34
      %s28 = sphi 0, %s26
      %s29 = sphi 0, %s27
      %s30 = sphi 0, %s28
      %s31 = sphi 0, %s29
      %s43 = sphi 0, %s45
      %s46 = sphi 0, %s43
      %s47 = sphi 0, %s46
      %s63 = sphi 0, %s47
      %s69 = sphi 0, %s71
      %s72 = sphi 0, %s69
      %s73 = sphi 0, %s72
      %s89 = sphi 0, %s73
      %s93 = sphi 0, %s93
      %s95 = sphi 0, %s93
      %s96 = sphi 0, %s95
      %s110 = sphi 0, %s96
      %s114 = sphi 0, %s114
      %s116 = sphi 0, %s114
      %s117 = sphi 0, %s116
      %s131 = sphi 0, %s117
      %s139 = sphi 0, %s141
      %s142 = sphi 0, %s139
      %s143 = sphi 0, %s142
      %s159 = sphi 0, %s143
      %s165 = sphi 0, %s167
      %s168 = sphi 0, %s165
      %s169 = sphi 0, %s168
      %s185 = sphi 0, %s169
      %s193 = sphi 0, %s195
      %s196 = sphi 0, %s193
      %s197 = sphi 0, %s196
      %s213 = sphi 0, %s197
      %s219 = sphi 0, %s221
      %s222 = sphi 0, %s219
      %s223 = sphi 0, %s222
      %s239 = sphi 0, %s223
      %s247 = sphi 0, %s249
      %s250 = sphi 0, %s247
      %s251 = sphi 0, %s250
      %s267 = sphi 0, %s251
      %s273 = sphi 0, %s275
      %s276 = sphi 0, %s273
      %s277 = sphi 0, %s276
      %s293 = sphi 0, %s277
    $region4: #{tpu_custom_call.1} parent=1 // loop_header_branch
      %22 = sbr.rel (%p20) target = $region8
    $region5: #{tpu_custom_call.1} parent=1 // loop_body
      %s24 = ssub.s32 %s19, 1
      %s25 = ssub.s32 %s19, 2
      %s32 = sadd.s32 1, %s27
      %p33 = scmp.ge.s32.totalorder %s32, 2
      %s34 = scalar_select %p33, 0, %s32
      %s35 = sadd.s32 1, %s26
      %s36 = scalar_select %p33, %s35, %s26
      %p37 = scmp.ge.s32.totalorder %s36, 2
      %s38 = scalar_select %p37, 0, %s36
      %s39 = ssub.s32 %s26, %s38
      %s40 = ssub.s32 %s27, %s34
      %s41 = sor.u32 %s39, %s40
      %p42 = scmp.eq.s32.totalorder %s41, 0
      %s44 = sadd.s32 %s43, 1
      %s45 = scalar_select %p42, %s43, %s44
      %p48 = pneg %p42
      %p49 = scmp.eq.s32.totalorder %s19, 3
      %p50 = por %p48, %p49
      %p51 = scmp.ne.s32.totalorder %s43, %s46
      %p52 = scmp.eq.s32.totalorder %s19, 0
      %p53 = por %p51, %p52
      %p54 = scmp.ne.s32.totalorder %s43, %s46
      %p55 = scmp.eq.s32.totalorder %s24, 3
      %p56 = por %p54, %p55
      %p57 = scmp.ne.s32.totalorder %s46, %s47
      %p58 = scmp.eq.s32.totalorder %s24, 0
      %p59 = por %p57, %p58
      %p60 = scmp.ne.s32.totalorder %s46, %s47
      %p61 = scmp.eq.s32.totalorder %s25, 3
      %p62 = por %p60, %p61
      %p64 = scmp.ne.s32.totalorder %s47, %s63
      %p65 = scmp.eq.s32.totalorder %s25, 0
      %p66 = por %p64, %p65
      %s67 = ssub.s32 %s26, %s38
      %p68 = scmp.eq.s32.totalorder %s67, 0
      %s70 = sadd.s32 %s69, 1
      %s71 = scalar_select %p68, %s69, %s70
      %p74 = pneg %p68
      %p75 = scmp.eq.s32.totalorder %s19, 3
      %p76 = por %p74, %p75
      %p77 = scmp.ne.s32.totalorder %s69, %s72
      %p78 = scmp.eq.s32.totalorder %s19, 0
      %p79 = por %p77, %p78
      %p80 = scmp.ne.s32.totalorder %s69, %s72
      %p81 = scmp.eq.s32.totalorder %s24, 3
      %p82 = por %p80, %p81
      %p83 = scmp.ne.s32.totalorder %s72, %s73
      %p84 = scmp.eq.s32.totalorder %s24, 0
      %p85 = por %p83, %p84
      %p86 = scmp.ne.s32.totalorder %s72, %s73
      %p87 = scmp.eq.s32.totalorder %s25, 3
      %p88 = por %p86, %p87
      %p90 = scmp.ne.s32.totalorder %s73, %s89
      %p91 = scmp.eq.s32.totalorder %s25, 0
      %p92 = por %p90, %p91
      %s94 = sadd.s32 %s93, 1
      %p97 = scmp.eq.s32.totalorder %s19, 3
      %p98 = scmp.ne.s32.totalorder %s93, %s95
      %p99 = scmp.eq.s32.totalorder %s19, 0
      %p100 = por %p98, %p99
      %p101 = scmp.ne.s32.totalorder %s93, %s95
      %p102 = scmp.eq.s32.totalorder %s24, 3
      %p103 = por %p101, %p102
      %p104 = scmp.ne.s32.totalorder %s95, %s96
      %p105 = scmp.eq.s32.totalorder %s24, 0
      %p106 = por %p104, %p105
      %p107 = scmp.ne.s32.totalorder %s95, %s96
      %p108 = scmp.eq.s32.totalorder %s25, 3
      %p109 = por %p107, %p108
      %p111 = scmp.ne.s32.totalorder %s96, %s110
      %p112 = scmp.eq.s32.totalorder %s25, 0
      %p113 = por %p111, %p112
      %s115 = sadd.s32 %s114, 1
      %p118 = scmp.eq.s32.totalorder %s19, 3
      %p119 = scmp.ne.s32.totalorder %s114, %s116
      %p120 = scmp.eq.s32.totalorder %s19, 0
      %p121 = por %p119, %p120
      %p122 = scmp.ne.s32.totalorder %s114, %s116
      %p123 = scmp.eq.s32.totalorder %s24, 3
      %p124 = por %p122, %p123
      %p125 = scmp.ne.s32.totalorder %s116, %s117
      %p126 = scmp.eq.s32.totalorder %s24, 0
      %p127 = por %p125, %p126
      %p128 = scmp.ne.s32.totalorder %s116, %s117
      %p129 = scmp.eq.s32.totalorder %s25, 3
      %p130 = por %p128, %p129
      %p132 = scmp.ne.s32.totalorder %s117, %s131
      %p133 = scmp.eq.s32.totalorder %s25, 0
      %p134 = por %p132, %p133
      %s135 = ssub.s32 %s26, %s38
      %s136 = ssub.s32 %s27, %s34
      %s137 = sor.u32 %s135, %s136
      %p138 = scmp.eq.s32.totalorder %s137, 0
      %s140 = sadd.s32 %s139, 1
      %s141 = scalar_select %p138, %s139, %s140
      %p144 = pneg %p138
      %p145 = scmp.eq.s32.totalorder %s19, 3
      %p146 = por %p144, %p145
      %p147 = scmp.ne.s32.totalorder %s139, %s142
      %p148 = scmp.eq.s32.totalorder %s19, 0
      %p149 = por %p147, %p148
      %p150 = scmp.ne.s32.totalorder %s139, %s142
      %p151 = scmp.eq.s32.totalorder %s24, 3
      %p152 = por %p150, %p151
      %p153 = scmp.ne.s32.totalorder %s142, %s143
      %p154 = scmp.eq.s32.totalorder %s24, 0
      %p155 = por %p153, %p154
      %p156 = scmp.ne.s32.totalorder %s142, %s143
      %p157 = scmp.eq.s32.totalorder %s25, 3
      %p158 = por %p156, %p157
      %p160 = scmp.ne.s32.totalorder %s143, %s159
      %p161 = scmp.eq.s32.totalorder %s25, 0
      %p162 = por %p160, %p161
      %s163 = ssub.s32 %s26, %s38
      %p164 = scmp.eq.s32.totalorder %s163, 0
      %s166 = sadd.s32 %s165, 1
      %s167 = scalar_select %p164, %s165, %s166
      %p170 = pneg %p164
      %p171 = scmp.eq.s32.totalorder %s19, 3
      %p172 = por %p170, %p171
      %p173 = scmp.ne.s32.totalorder %s165, %s168
      %p174 = scmp.eq.s32.totalorder %s19, 0
      %p175 = por %p173, %p174
      %p176 = scmp.ne.s32.totalorder %s165, %s168
      %p177 = scmp.eq.s32.totalorder %s24, 3
      %p178 = por %p176, %p177
      %p179 = scmp.ne.s32.totalorder %s168, %s169
      %p180 = scmp.eq.s32.totalorder %s24, 0
      %p181 = por %p179, %p180
      %p182 = scmp.ne.s32.totalorder %s168, %s169
      %p183 = scmp.eq.s32.totalorder %s25, 3
      %p184 = por %p182, %p183
      %p186 = scmp.ne.s32.totalorder %s169, %s185
      %p187 = scmp.eq.s32.totalorder %s25, 0
      %p188 = por %p186, %p187
      %s189 = ssub.s32 %s26, %s38
      %s190 = ssub.s32 %s27, %s34
      %s191 = sor.u32 %s189, %s190
      %p192 = scmp.eq.s32.totalorder %s191, 0
      %s194 = sadd.s32 %s193, 1
      %s195 = scalar_select %p192, %s193, %s194
      %p198 = pneg %p192
      %p199 = scmp.eq.s32.totalorder %s19, 3
      %p200 = por %p198, %p199
      %p201 = scmp.ne.s32.totalorder %s193, %s196
      %p202 = scmp.eq.s32.totalorder %s19, 0
      %p203 = por %p201, %p202
      %p204 = scmp.ne.s32.totalorder %s193, %s196
      %p205 = scmp.eq.s32.totalorder %s24, 3
      %p206 = por %p204, %p205
      %p207 = scmp.ne.s32.totalorder %s196, %s197
      %p208 = scmp.eq.s32.totalorder %s24, 0
      %p209 = por %p207, %p208
      %p210 = scmp.ne.s32.totalorder %s196, %s197
      %p211 = scmp.eq.s32.totalorder %s25, 3
      %p212 = por %p210, %p211
      %p214 = scmp.ne.s32.totalorder %s197, %s213
      %p215 = scmp.eq.s32.totalorder %s25, 0
      %p216 = por %p214, %p215
      %s217 = ssub.s32 %s26, %s38
      %p218 = scmp.eq.s32.totalorder %s217, 0
      %s220 = sadd.s32 %s219, 1
      %s221 = scalar_select %p218, %s219, %s220
      %p224 = pneg %p218
      %p225 = scmp.eq.s32.totalorder %s19, 3
      %p226 = por %p224, %p225
      %p227 = scmp.ne.s32.totalorder %s219, %s222
      %p228 = scmp.eq.s32.totalorder %s19, 0
      %p229 = por %p227, %p228
      %p230 = scmp.ne.s32.totalorder %s219, %s222
      %p231 = scmp.eq.s32.totalorder %s24, 3
      %p232 = por %p230, %p231
      %p233 = scmp.ne.s32.totalorder %s222, %s223
      %p234 = scmp.eq.s32.totalorder %s24, 0
      %p235 = por %p233, %p234
      %p236 = scmp.ne.s32.totalorder %s222, %s223
      %p237 = scmp.eq.s32.totalorder %s25, 3
      %p238 = por %p236, %p237
      %p240 = scmp.ne.s32.totalorder %s223, %s239
      %p241 = scmp.eq.s32.totalorder %s25, 0
      %p242 = por %p240, %p241
      %s243 = ssub.s32 %s26, %s38
      %s244 = ssub.s32 %s27, %s34
      %s245 = sor.u32 %s243, %s244
      %p246 = scmp.eq.s32.totalorder %s245, 0
      %s248 = sadd.s32 %s247, 1
      %s249 = scalar_select %p246, %s247, %s248
      %p252 = pneg %p246
      %p253 = scmp.eq.s32.totalorder %s19, 3
      %p254 = por %p252, %p253
      %p255 = scmp.ne.s32.totalorder %s247, %s250
      %p256 = scmp.eq.s32.totalorder %s19, 0
      %p257 = por %p255, %p256
      %p258 = scmp.ne.s32.totalorder %s247, %s250
      %p259 = scmp.eq.s32.totalorder %s24, 3
      %p260 = por %p258, %p259
      %p261 = scmp.ne.s32.totalorder %s250, %s251
      %p262 = scmp.eq.s32.totalorder %s24, 0
      %p263 = por %p261, %p262
      %p264 = scmp.ne.s32.totalorder %s250, %s251
      %p265 = scmp.eq.s32.totalorder %s25, 3
      %p266 = por %p264, %p265
      %p268 = scmp.ne.s32.totalorder %s251, %s267
      %p269 = scmp.eq.s32.totalorder %s25, 0
      %p270 = por %p268, %p269
      %s271 = ssub.s32 %s26, %s38
      %p272 = scmp.eq.s32.totalorder %s271, 0
      %s274 = sadd.s32 %s273, 1
      %s275 = scalar_select %p272, %s273, %s274
      %p278 = pneg %p272
      %p279 = scmp.eq.s32.totalorder %s19, 3
      %p280 = por %p278, %p279
      %p281 = scmp.ne.s32.totalorder %s273, %s276
      %p282 = scmp.eq.s32.totalorder %s19, 0
      %p283 = por %p281, %p282
      %p284 = scmp.ne.s32.totalorder %s273, %s276
      %p285 = scmp.eq.s32.totalorder %s24, 3
      %p286 = por %p284, %p285
      %p287 = scmp.ne.s32.totalorder %s276, %s277
      %p288 = scmp.eq.s32.totalorder %s24, 0
      %p289 = por %p287, %p288
      %p290 = scmp.ne.s32.totalorder %s276, %s277
      %p291 = scmp.eq.s32.totalorder %s25, 3
      %p292 = por %p290, %p291
      %p294 = scmp.ne.s32.totalorder %s277, %s293
      %p295 = scmp.eq.s32.totalorder %s25, 0
      %p296 = por %p294, %p295
      %p297 = scmp.le.s32.totalorder 1, %s19
      %p298 = scmp.lt.s32.totalorder %s19, 5
      %p299 = pnand %p297, %p298
      %p300 = pneg %p299
      // Predicated region
      $region9: #{tpu_custom_call.1} parent=5 // pred_check
        _
      $region10: #{tpu_custom_call.1} parent=5 // pred_check_branch
        %302 = sbr.rel (%p299) target = $region12
      $region11: #{tpu_custom_call.1} parent=5 // pred_region
        %s303 = ssub.s32 %s19, 1
        // Predicated region
        $region13: #{tpu_custom_call.1} parent=11 // pred_check
          %p304 = pneg %p106
        $region14: #{tpu_custom_call.1} parent=11 // pred_check_branch
          %306 = sbr.rel (%p304) target = $region16
        $region15: #{tpu_custom_call.1} parent=11 // pred_region
          _
        $region16: #{tpu_custom_call.1} parent=11 // pred_fallthru
          _
        // Predicated region
        $region17: #{tpu_custom_call.1} parent=11 // pred_check
          %p307 = pneg %p127
        $region18: #{tpu_custom_call.1} parent=11 // pred_check_branch
          %309 = sbr.rel (%p307) target = $region20
        $region19: #{tpu_custom_call.1} parent=11 // pred_region
          _
        $region20: #{tpu_custom_call.1} parent=11 // pred_fallthru
          _
      $region12: #{tpu_custom_call.1} parent=5 // pred_fallthru
        _
      %p310 = scmp.lt.s32.totalorder %s19, 4
      // Predicated region
      $region21: #{tpu_custom_call.1} parent=5 // pred_check
        %p311 = pneg %p310
      $region22: #{tpu_custom_call.1} parent=5 // pred_check_branch
        %313 = sbr.rel (%p311) target = $region24
      $region23: #{tpu_custom_call.1} parent=5 // pred_region
        // Predicated region
        $region25: #{tpu_custom_call.1} parent=23 // pred_check
          %p314 = pneg %p53
        $region26: #{tpu_custom_call.1} parent=23 // pred_check_branch
          %316 = sbr.rel (%p314) target = $region28
        $region27: #{tpu_custom_call.1} parent=23 // pred_region
          %s317 = smul.u32 4, %s27
          %p318 = scmp.lt.s32.totalorder %s26, 1
          %s319 = scalar_select %p318, %s26, 1
          %p320 = scmp.lt.s32.totalorder %s317, 7
          %s321 = scalar_select %p320, %s317, 7
          %s322 = smul.addr %s319, 8
          %s323 = sadd.s32 %s321, %s322
          %s324 = smul.addr %s323, 8
          %s325 = scalar_lea.vmem %s0, %s324
          %s326 = smul.u32 4, %s27
        $region28: #{tpu_custom_call.1} parent=23 // pred_fallthru
          _
        // Predicated region
        $region29: #{tpu_custom_call.1} parent=23 // pred_check
          %p327 = pneg %p79
        $region30: #{tpu_custom_call.1} parent=23 // pred_check_branch
          %329 = sbr.rel (%p327) target = $region32
        $region31: #{tpu_custom_call.1} parent=23 // pred_region
          %p330 = scmp.lt.s32.totalorder %s26, 1
          %s331 = scalar_select %p330, %s26, 1
          %s332 = smul.addr %s331, 16
          %s333 = smul.addr %s332, 8
          %s334 = scalar_lea.vmem %s1, %s333
        $region32: #{tpu_custom_call.1} parent=23 // pred_fallthru
          _
        // Predicated region
        $region33: #{tpu_custom_call.1} parent=23 // pred_check
          %p335 = pneg %p149
        $region34: #{tpu_custom_call.1} parent=23 // pred_check_branch
          %337 = sbr.rel (%p335) target = $region36
        $region35: #{tpu_custom_call.1} parent=23 // pred_region
          %s338 = smul.u32 4, %s27
          %p339 = scmp.lt.s32.totalorder %s26, 1
          %s340 = scalar_select %p339, %s26, 1
          %p341 = scmp.lt.s32.totalorder %s338, 7
          %s342 = scalar_select %p341, %s338, 7
          %s343 = smul.addr %s340, 8
          %s344 = sadd.s32 %s342, %s343
          %s345 = smul.addr %s344, 8
          %s346 = scalar_lea.vmem %s4, %s345
          %s347 = smul.u32 4, %s27
        $region36: #{tpu_custom_call.1} parent=23 // pred_fallthru
          _
        // Predicated region
        $region37: #{tpu_custom_call.1} parent=23 // pred_check
          %p348 = pneg %p175
        $region38: #{tpu_custom_call.1} parent=23 // pred_check_branch
          %350 = sbr.rel (%p348) target = $region40
        $region39: #{tpu_custom_call.1} parent=23 // pred_region
          %p351 = scmp.lt.s32.totalorder %s26, 1
          %s352 = scalar_select %p351, %s26, 1
          %s353 = scalar_lea.vmem %s5, %s352
        $region40: #{tpu_custom_call.1} parent=23 // pred_fallthru
          _
      $region24: #{tpu_custom_call.1} parent=5 // pred_fallthru
        _
      %p354 = scmp.le.s32.totalorder 1, %s19
      %p355 = scmp.lt.s32.totalorder %s19, 5
      %p356 = pnand %p354, %p355
      %p357 = pneg %p356
      // Predicated region
      $region41: #{tpu_custom_call.1} parent=5 // pred_check
        _
      $region42: #{tpu_custom_call.1} parent=5 // pred_check_branch
        %359 = sbr.rel (%p356) target = $region44
      $region43: #{tpu_custom_call.1} parent=5 // pred_region
        %s360 = ssub.s32 %s19, 1
        %s361 = smul.u32 4, %s29
        %p362 = scmp.lt.s32.totalorder %s28, 1
        %s363 = scalar_select %p362, %s28, 1
        %p364 = scmp.lt.s32.totalorder %s361, 7
        %s365 = scalar_select %p364, %s361, 7
        %s366 = smul.addr %s363, 8
        %s367 = sadd.s32 %s365, %s366
        %s368 = smul.addr %s367, 8
        %s369 = scalar_lea.vmem %s0, %s368
        %p370 = pneg %p59
        %p371 = pneg %p56
        %p372 = scmp.lt.s32.totalorder %s28, 1
        %s373 = scalar_select %p372, %s28, 1
        %s374 = smul.addr %s373, 16
        %s375 = smul.addr %s374, 8
        %s376 = scalar_lea.vmem %s1, %s375
        %p377 = pneg %p85
        %p378 = pneg %p82
        %p379 = pneg %p106
        %p380 = pneg %p103
        %p381 = pneg %p127
        %p382 = pneg %p124
        %s383 = smul.u32 4, %s29
        %p384 = scmp.lt.s32.totalorder %s28, 1
        %s385 = scalar_select %p384, %s28, 1
        %p386 = scmp.lt.s32.totalorder %s383, 7
        %s387 = scalar_select %p386, %s383, 7
        %s388 = smul.addr %s385, 8
        %s389 = sadd.s32 %s387, %s388
        %s390 = smul.addr %s389, 8
        %s391 = scalar_lea.vmem %s4, %s390
        %p392 = pneg %p155
        %p393 = pneg %p152
        %p394 = scmp.lt.s32.totalorder %s28, 1
        %s395 = scalar_select %p394, %s28, 1
        %s396 = scalar_lea.vmem %s5, %s395
        %p397 = pneg %p181
        %p398 = pneg %p178
        %p399 = pneg %p209
        %p400 = pneg %p206
        %s401 = smul.u32 4, %s29
        %p402 = scmp.lt.s32.totalorder %s28, 1
        %s403 = scalar_select %p402, %s28, 1
        %p404 = scmp.lt.s32.totalorder %s401, 7
        %s405 = scalar_select %p404, %s401, 7
        %s406 = smul.addr %s403, 8
        %s407 = sadd.s32 %s405, %s406
        %s408 = smul.addr %s407, 8
        %s409 = scalar_lea.vmem %s6, %s408
        %p410 = pneg %p235
        %p411 = pneg %p232
        %p412 = scmp.lt.s32.totalorder %s28, 1
        %s413 = scalar_select %p412, %s28, 1
        %s414 = smul.addr %s413, 16
        %s415 = smul.addr %s414, 8
        %s416 = scalar_lea.vmem %s7, %s415
        %p417 = pneg %p263
        %p418 = pneg %p260
        %s419 = smul.u32 4, %s29
        %p420 = scmp.lt.s32.totalorder %s28, 1
        %s421 = scalar_select %p420, %s28, 1
        %p422 = scmp.lt.s32.totalorder %s419, 7
        %s423 = scalar_select %p422, %s419, 7
        %s424 = smul.addr %s421, 8
        %s425 = sadd.s32 %s423, %s424
        %s426 = smul.addr %s425, 8
        %s427 = scalar_lea.vmem %s8, %s426
        %p428 = pneg %p289
        %p429 = pneg %p286
        %s430 = sand.u32 %s276, 1
        %s431 = scalar_lea.sflag [#allocation5], %s430
        %s432 = sand.u32 %s276, 1
        %s433 = scalar_lea.vmem [#allocation4], %s432
        %s434 = smul.u32 4, %s29
        %p435 = scmp.lt.s32.totalorder %s28, 1
        %s436 = scalar_select %p435, %s28, 1
        %p437 = scmp.lt.s32.totalorder %s434, 7
        %s438 = scalar_select %p437, %s434, 7
        %s439 = smul.addr %s436, 8
        %s440 = sadd.s32 %s438, %s439
        %s441 = smul.addr %s440, 8
        %s442 = scalar_lea.vmem %s0, %s441
        %s443 = smul.u32 4, %s29
        %p444 = scmp.lt.s32.totalorder %s28, 1
        %s445 = scalar_select %p444, %s28, 1
        %s446 = smul.addr %s445, 16
        %s447 = smul.addr %s446, 8
        %s448 = scalar_lea.vmem %s1, %s447
        %s449 = smul.u32 4, %s29
        %p450 = scmp.lt.s32.totalorder %s28, 1
        %s451 = scalar_select %p450, %s28, 1
        %p452 = scmp.lt.s32.totalorder %s449, 7
        %s453 = scalar_select %p452, %s449, 7
        %s454 = smul.addr %s451, 8
        %s455 = sadd.s32 %s453, %s454
        %s456 = smul.addr %s455, 8
        %s457 = scalar_lea.vmem %s4, %s456
        %s458 = smul.u32 4, %s29
        %p459 = scmp.lt.s32.totalorder %s28, 1
        %s460 = scalar_select %p459, %s28, 1
        %s461 = scalar_lea.vmem %s5, %s460
        %s462 = smul.u32 4, %s29
        %p463 = scmp.lt.s32.totalorder %s28, 1
        %s464 = scalar_select %p463, %s28, 1
        %p465 = scmp.lt.s32.totalorder %s462, 7
        %s466 = scalar_select %p465, %s462, 7
        %s467 = smul.addr %s464, 8
        %s468 = sadd.s32 %s466, %s467
        %s469 = smul.addr %s468, 8
        %s470 = scalar_lea.vmem %s6, %s469
        %s471 = smul.u32 4, %s29
        %p472 = scmp.lt.s32.totalorder %s28, 1
        %s473 = scalar_select %p472, %s28, 1
        %s474 = smul.addr %s473, 16
        %s475 = smul.addr %s474, 8
        %s476 = scalar_lea.vmem %s7, %s475
        %s477 = smul.u32 4, %s29
        %p478 = scmp.lt.s32.totalorder %s28, 1
        %s479 = scalar_select %p478, %s28, 1
        %p480 = scmp.lt.s32.totalorder %s477, 7
        %s481 = scalar_select %p480, %s477, 7
        %s482 = smul.addr %s479, 8
        %s483 = sadd.s32 %s481, %s482
        %s484 = smul.addr %s483, 8
        %s485 = scalar_lea.vmem %s8, %s484
        %s486 = smul.u32 4, %s29
        %v487 = vld [vmem:[%s2] sm:$0xff]
        %v488 = vld [vmem:[%s2 + $0x8] sm:$0xff]
        %v489 = vld [vmem:[%s2 + $0x10] sm:$0xff]
        %v490 = vld [vmem:[%s2 + $0x18] sm:$0xff]
        %v491 = vld [vmem:[%s3] sm:$0x1]
        %p492 = scmp.eq.s32.totalorder %s29, 0
        // Predicated region
        $region45: #{tpu_custom_call.1} parent=43 // pred_check
          %p493 = pneg %p492
        $region46: #{tpu_custom_call.1} parent=43 // pred_check_branch
          %495 = sbr.rel (%p493) target = $region48
        $region47: #{tpu_custom_call.1} parent=43 // pred_region
          %v496 = vld [vmem:[%s448] sm:$0xff]
          %v497 = vld [vmem:[%s448 + $0x8] sm:$0xff]
          %v498 = vld [vmem:[%s448 + $0x10] sm:$0xff]
          %v499 = vld [vmem:[%s448 + $0x18] sm:$0xff]
          %v500 = vld [vmem:[%s448 + $0x20] sm:$0xff]
          %v501 = vld [vmem:[%s448 + $0x28] sm:$0xff]
          %v502 = vld [vmem:[%s448 + $0x30] sm:$0xff]
          %v503 = vld [vmem:[%s448 + $0x38] sm:$0xff]
          %v504 = vld [vmem:[%s448 + $0x40] sm:$0xff]
          %v505 = vld [vmem:[%s448 + $0x48] sm:$0xff]
          %v506 = vld [vmem:[%s448 + $0x50] sm:$0xff]
          %v507 = vld [vmem:[%s448 + $0x58] sm:$0xff]
          %v508 = vld [vmem:[%s448 + $0x60] sm:$0xff]
          %v509 = vld [vmem:[%s448 + $0x68] sm:$0xff]
          %v510 = vld [vmem:[%s448 + $0x70] sm:$0xff]
          %v511 = vld [vmem:[%s448 + $0x78] sm:$0xff]
          %v513 = vlaneseq
          %v514 = vshrl.u32 %v513, 7
          %v515 = vsub.s32 0, %v514
          %v516 = vrot.slane %v491, %v515
          %vm518 = vcmask 261120
          %v520 = vsel %vm518, %v496, 0
          %v523 = vsel %vm518, %v497, 0
          %v526 = vsel %vm518, %v498, 0
          %v529 = vsel %vm518, %v499, 0
          %v532 = vsel %vm518, %v500, 0
          %v535 = vsel %vm518, %v501, 0
          %v538 = vsel %vm518, %v502, 0
          %v541 = vsel %vm518, %v503, 0
          %v544 = vsel %vm518, %v504, 0
          %v547 = vsel %vm518, %v505, 0
          %v550 = vsel %vm518, %v506, 0
          %v553 = vsel %vm518, %v507, 0
          %v556 = vsel %vm518, %v508, 0
          %v559 = vsel %vm518, %v509, 0
          %v562 = vsel %vm518, %v510, 0
          %v565 = vsel %vm518, %v511, 0
          %567 = vmatprep.subr.mxu0 0.0
          %568 = vmatpush1.msra.mxu0 %v487
          %569 = vmatprep.subr.mxu0 0.0
          %570 = vmatpush1.msra.mxu0 %v488
          %571 = vmatprep.subr.mxu0 0.0
          %572 = vmatpush1.msra.mxu0 %v489
          %573 = vmatprep.subr.mxu0 0.0
          %574 = vmatpush1.msra.mxu0 %v490
          %575 = vmatprep.subr.mxu0 0.0
          %576 = vmatpush1.msra.mxu0 0.0
          %577 = vmatprep.subr.mxu0 0.0
          %578 = vmatpush1.msra.mxu0 0.0
          %579 = vmatprep.subr.mxu0 0.0
          %580 = vmatpush1.msra.mxu0 0.0
          %581 = vmatprep.subr.mxu0 0.0
          %582 = vmatpush1.msra.mxu0 0.0
          %583 = vmatprep.subr.mxu0 0.0
          %584 = vmatpush1.msra.mxu0 0.0
          %585 = vmatprep.subr.mxu0 0.0
          %586 = vmatpush1.msra.mxu0 0.0
          %587 = vmatprep.subr.mxu0 0.0
          %588 = vmatpush1.msra.mxu0 0.0
          %589 = vmatprep.subr.mxu0 0.0
          %590 = vmatpush1.msra.mxu0 0.0
          %591 = vmatprep.subr.mxu0 0.0
          %592 = vmatpush1.msra.mxu0 0.0
          %593 = vmatprep.subr.mxu0 0.0
          %594 = vmatpush1.msra.mxu0 0.0
          %595 = vmatprep.subr.mxu0 0.0
          %596 = vmatpush1.msra.mxu0 0.0
          %597 = vmatprep.subr.mxu0 0.0
          %598 = vmatpush1.msra.mxu0 0.0
          %599 = vmatprep.subr.mxu0 0.0
          %600 = vmatpush1.msra.mxu0 0.0
          %601 = vmatprep.subr.mxu0 0.0
          %602 = vmatpush1.msra.mxu0 0.0
          %603 = vmatprep.subr.mxu0 0.0
          %604 = vmatpush1.msra.mxu0 0.0
          %605 = vmatprep.subr.mxu0 0.0
          %606 = vmatpush1.msra.mxu0 0.0
          %607 = vmatprep.subr.mxu0 0.0
          %608 = vmatpush1.msra.mxu0 0.0
          %609 = vmatprep.subr.mxu0 0.0
          %610 = vmatpush1.msra.mxu0 0.0
          %611 = vmatprep.subr.mxu0 0.0
          %612 = vmatpush1.msra.mxu0 0.0
          %613 = vmatprep.subr.mxu0 0.0
          %614 = vmatpush1.msra.mxu0 0.0
          %615 = vmatprep.subr.mxu0 0.0
          %616 = vmatpush1.msra.mxu0 0.0
          %617 = vmatprep.subr.mxu0 0.0
          %618 = vmatpush1.msra.mxu0 0.0
          %619 = vmatprep.subr.mxu0 0.0
          %620 = vmatpush1.msra.mxu0 0.0
          %621 = vmatprep.subr.mxu0 0.0
          %622 = vmatpush1.msra.mxu0 0.0
          %623 = vmatprep.subr.mxu0 0.0
          %624 = vmatpush1.msra.mxu0 0.0
          %625 = vmatprep.subr.mxu0 0.0
          %626 = vmatpush1.msra.mxu0 0.0
          %627 = vmatprep.subr.mxu0 0.0
          %628 = vmatpush1.msra.mxu0 0.0
          %629 = vmatprep.subr.mxu0 0.0
          %630 = vmatpush1.msra.mxu0 0.0
          %631 = vmatprep.mubr.f32.mxu0 0.0
          %632 = vmatmul.mubr.f32.gmra.mrb[0].mxu0 %v520
          %v633 = vpop.f32.mrb[0].mxu0
          %v634 = vadd.f32 %v516, %v633
          %v635 = vpop.f32.mrb[0].mxu0
          %636 = vmatprep.mubr.f32.mxu0 0.0
          %637 = vmatmul.mubr.f32.gmra.mrb[0].mxu0 %v523
          %v638 = vpop.f32.mrb[0].mxu0
          %v639 = vadd.f32 %v516, %v638
          %v640 = vpop.f32.mrb[0].mxu0
          %641 = vmatprep.mubr.f32.mxu0 0.0
          %642 = vmatmul.mubr.f32.gmra.mrb[0].mxu0 %v526
          %v643 = vpop.f32.mrb[0].mxu0
          %v644 = vadd.f32 %v516, %v643
          %v645 = vpop.f32.mrb[0].mxu0
          %646 = vmatprep.mubr.f32.mxu0 0.0
          %647 = vmatmul.mubr.f32.gmra.mrb[0].mxu0 %v529
          %v648 = vpop.f32.mrb[0].mxu0
          %v649 = vadd.f32 %v516, %v648
          %v650 = vpop.f32.mrb[0].mxu0
          %651 = vmatprep.mubr.f32.mxu0 0.0
          %652 = vmatmul.mubr.f32.gmra.mrb[0].mxu0 %v532
          %v653 = vpop.f32.mrb[0].mxu0
          %v654 = vadd.f32 %v516, %v653
          %v655 = vpop.f32.mrb[0].mxu0
          %656 = vmatprep.mubr.f32.mxu0 0.0
          %657 = vmatmul.mubr.f32.gmra.mrb[0].mxu0 %v535
          %v658 = vpop.f32.mrb[0].mxu0
          %v659 = vadd.f32 %v516, %v658
          %v660 = vpop.f32.mrb[0].mxu0
          %661 = vmatprep.mubr.f32.mxu0 0.0
          %662 = vmatmul.mubr.f32.gmra.mrb[0].mxu0 %v538
          %v663 = vpop.f32.mrb[0].mxu0
          %v664 = vadd.f32 %v516, %v663
          %v665 = vpop.f32.mrb[0].mxu0
          %666 = vmatprep.mubr.f32.mxu0 0.0
          %667 = vmatmul.mubr.f32.gmra.mrb[0].mxu0 %v541
          %v668 = vpop.f32.mrb[0].mxu0
          %v669 = vadd.f32 %v516, %v668
          %v670 = vpop.f32.mrb[0].mxu0
          %671 = vmatprep.mubr.f32.mxu0 0.0
          %672 = vmatmul.mubr.f32.gmra.mrb[0].mxu0 %v544
          %v673 = vpop.f32.mrb[0].mxu0
          %v674 = vadd.f32 %v516, %v673
          %v675 = vpop.f32.mrb[0].mxu0
          %676 = vmatprep.mubr.f32.mxu0 0.0
          %677 = vmatmul.mubr.f32.gmra.mrb[0].mxu0 %v547
          %v678 = vpop.f32.mrb[0].mxu0
          %v679 = vadd.f32 %v516, %v678
          %v680 = vpop.f32.mrb[0].mxu0
          %681 = vmatprep.mubr.f32.mxu0 0.0
          %682 = vmatmul.mubr.f32.gmra.mrb[0].mxu0 %v550
          %v683 = vpop.f32.mrb[0].mxu0
          %v684 = vadd.f32 %v516, %v683
          %v685 = vpop.f32.mrb[0].mxu0
          %686 = vmatprep.mubr.f32.mxu0 0.0
          %687 = vmatmul.mubr.f32.gmra.mrb[0].mxu0 %v553
          %v688 = vpop.f32.mrb[0].mxu0
          %v689 = vadd.f32 %v516, %v688
          %v690 = vpop.f32.mrb[0].mxu0
          %691 = vmatprep.mubr.f32.mxu0 0.0
          %692 = vmatmul.mubr.f32.gmra.mrb[0].mxu0 %v556
          %v693 = vpop.f32.mrb[0].mxu0
          %v694 = vadd.f32 %v516, %v693
          %v695 = vpop.f32.mrb[0].mxu0
          %696 = vmatprep.mubr.f32.mxu0 0.0
          %697 = vmatmul.mubr.f32.gmra.mrb[0].mxu0 %v559
          %v698 = vpop.f32.mrb[0].mxu0
          %v699 = vadd.f32 %v516, %v698
          %v700 = vpop.f32.mrb[0].mxu0
          %701 = vmatprep.mubr.f32.mxu0 0.0
          %702 = vmatmul.mubr.f32.gmra.mrb[0].mxu0 %v562
          %v703 = vpop.f32.mrb[0].mxu0
          %v704 = vadd.f32 %v516, %v703
          %v705 = vpop.f32.mrb[0].mxu0
          %706 = vmatprep.mubr.f32.mxu0 0.0
          %707 = vmatmul.mubr.f32.gmra.mrb[0].mxu0 %v565
          %v708 = vpop.f32.mrb[0].mxu0
          %v709 = vadd.f32 %v516, %v708
          %v710 = vpop.f32.mrb[0].mxu0
          %711 = vdwg.mxu0
          %712 = vst.msk [vmem:[%s476] sm:$0xff] %vm518, %v634
          %713 = vst.msk [vmem:[%s476 + $0x8] sm:$0xff] %vm518, %v639
          %714 = vst.msk [vmem:[%s476 + $0x10] sm:$0xff] %vm518, %v644
          %715 = vst.msk [vmem:[%s476 + $0x18] sm:$0xff] %vm518, %v649
          %716 = vst.msk [vmem:[%s476 + $0x20] sm:$0xff] %vm518, %v654
          %717 = vst.msk [vmem:[%s476 + $0x28] sm:$0xff] %vm518, %v659
          %718 = vst.msk [vmem:[%s476 + $0x30] sm:$0xff] %vm518, %v664
          %719 = vst.msk [vmem:[%s476 + $0x38] sm:$0xff] %vm518, %v669
          %720 = vst.msk [vmem:[%s476 + $0x40] sm:$0xff] %vm518, %v674
          %721 = vst.msk [vmem:[%s476 + $0x48] sm:$0xff] %vm518, %v679
          %722 = vst.msk [vmem:[%s476 + $0x50] sm:$0xff] %vm518, %v684
          %723 = vst.msk [vmem:[%s476 + $0x58] sm:$0xff] %vm518, %v689
          %724 = vst.msk [vmem:[%s476 + $0x60] sm:$0xff] %vm518, %v694
          %725 = vst.msk [vmem:[%s476 + $0x68] sm:$0xff] %vm518, %v699
          %726 = vst.msk [vmem:[%s476 + $0x70] sm:$0xff] %vm518, %v704
          %727 = vst.msk [vmem:[%s476 + $0x78] sm:$0xff] %vm518, %v709
          %728 = vst [vmem:[#allocation2] sm:$0x1] -1e+30
          %729 = vst [vmem:[#allocation3] sm:$0x1] 0.0
        $region48: #{tpu_custom_call.1} parent=43 // pred_fallthru
          _
        %v730 = vld [vmem:[%s442] sm:$0xff]
        %v731 = vld [vmem:[%s442 + $0x8] sm:$0xff]
        %v732 = vld [vmem:[%s442 + $0x10] sm:$0xff]
        %v733 = vld [vmem:[%s442 + $0x18] sm:$0xff]
        %v735 = vlaneseq
        %v736 = vshrl.u32 %v735, 7
        %v737 = vsub.s32 0, %v736
        %v738 = vrot.slane %v491, %v737
        %vm740 = vcmask 261120
        %v742 = vsel %vm740, %v730, 0
        %v745 = vsel %vm740, %v731, 0
        %v748 = vsel %vm740, %v732, 0
        %v751 = vsel %vm740, %v733, 0
        %753 = vmatprep.subr.mxu0 0.0
        %754 = vmatpush1.msra.mxu0 %v487
        %755 = vmatprep.subr.mxu0 0.0
        %756 = vmatpush1.msra.mxu0 %v488
        %757 = vmatprep.subr.mxu0 0.0
        %758 = vmatpush1.msra.mxu0 %v489
        %759 = vmatprep.subr.mxu0 0.0
        %760 = vmatpush1.msra.mxu0 %v490
        %761 = vmatprep.subr.mxu0 0.0
        %762 = vmatpush1.msra.mxu0 0.0
        %763 = vmatprep.subr.mxu0 0.0
        %764 = vmatpush1.msra.mxu0 0.0
        %765 = vmatprep.subr.mxu0 0.0
        %766 = vmatpush1.msra.mxu0 0.0
        %767 = vmatprep.subr.mxu0 0.0
        %768 = vmatpush1.msra.mxu0 0.0
        %769 = vmatprep.subr.mxu0 0.0
        %770 = vmatpush1.msra.mxu0 0.0
        %771 = vmatprep.subr.mxu0 0.0
        %772 = vmatpush1.msra.mxu0 0.0
        %773 = vmatprep.subr.mxu0 0.0
        %774 = vmatpush1.msra.mxu0 0.0
        %775 = vmatprep.subr.mxu0 0.0
        %776 = vmatpush1.msra.mxu0 0.0
        %777 = vmatprep.subr.mxu0 0.0
        %778 = vmatpush1.msra.mxu0 0.0
        %779 = vmatprep.subr.mxu0 0.0
        %780 = vmatpush1.msra.mxu0 0.0
        %781 = vmatprep.subr.mxu0 0.0
        %782 = vmatpush1.msra.mxu0 0.0
        %783 = vmatprep.subr.mxu0 0.0
        %784 = vmatpush1.msra.mxu0 0.0
        %785 = vmatprep.subr.mxu0 0.0
        %786 = vmatpush1.msra.mxu0 0.0
        %787 = vmatprep.subr.mxu0 0.0
        %788 = vmatpush1.msra.mxu0 0.0
        %789 = vmatprep.subr.mxu0 0.0
        %790 = vmatpush1.msra.mxu0 0.0
        %791 = vmatprep.subr.mxu0 0.0
        %792 = vmatpush1.msra.mxu0 0.0
        %793 = vmatprep.subr.mxu0 0.0
        %794 = vmatpush1.msra.mxu0 0.0
        %795 = vmatprep.subr.mxu0 0.0
        %796 = vmatpush1.msra.mxu0 0.0
        %797 = vmatprep.subr.mxu0 0.0
        %798 = vmatpush1.msra.mxu0 0.0
        %799 = vmatprep.subr.mxu0 0.0
        %800 = vmatpush1.msra.mxu0 0.0
        %801 = vmatprep.subr.mxu0 0.0
        %802 = vmatpush1.msra.mxu0 0.0
        %803 = vmatprep.subr.mxu0 0.0
        %804 = vmatpush1.msra.mxu0 0.0
        %805 = vmatprep.subr.mxu0 0.0
        %806 = vmatpush1.msra.mxu0 0.0
        %807 = vmatprep.subr.mxu0 0.0
        %808 = vmatpush1.msra.mxu0 0.0
        %809 = vmatprep.subr.mxu0 0.0
        %810 = vmatpush1.msra.mxu0 0.0
        %811 = vmatprep.subr.mxu0 0.0
        %812 = vmatpush1.msra.mxu0 0.0
        %813 = vmatprep.subr.mxu0 0.0
        %814 = vmatpush1.msra.mxu0 0.0
        %815 = vmatprep.subr.mxu0 0.0
        %816 = vmatpush1.msra.mxu0 0.0
        %817 = vmatprep.mubr.f32.mxu0 0.0
        %818 = vmatmul.mubr.f32.gmra.mrb[0].mxu0 %v742
        %v819 = vpop.f32.mrb[0].mxu0
        %v820 = vadd.f32 %v738, %v819
        %v821 = vpop.f32.mrb[0].mxu0
        %822 = vmatprep.mubr.f32.mxu0 0.0
        %823 = vmatmul.mubr.f32.gmra.mrb[0].mxu0 %v745
        %v824 = vpop.f32.mrb[0].mxu0
        %v825 = vadd.f32 %v738, %v824
        %v826 = vpop.f32.mrb[0].mxu0
        %827 = vmatprep.mubr.f32.mxu0 0.0
        %828 = vmatmul.mubr.f32.gmra.mrb[0].mxu0 %v748
        %v829 = vpop.f32.mrb[0].mxu0
        %v830 = vadd.f32 %v738, %v829
        %v831 = vpop.f32.mrb[0].mxu0
        %832 = vmatprep.mubr.f32.mxu0 0.0
        %833 = vmatmul.mubr.f32.gmra.mrb[0].mxu0 %v751
        %v834 = vpop.f32.mrb[0].mxu0
        %v835 = vadd.f32 %v738, %v834
        %v836 = vpop.f32.mrb[0].mxu0
        %837 = vdwg.mxu0
        %838 = vst.msk [vmem:[%s470] sm:$0xff] %vm740, %v820
        %839 = vst.msk [vmem:[%s470 + $0x8] sm:$0xff] %vm740, %v825
        %840 = vst.msk [vmem:[%s470 + $0x10] sm:$0xff] %vm740, %v830
        %841 = vst.msk [vmem:[%s470 + $0x18] sm:$0xff] %vm740, %v835
        %v842 = vld [vmem:[%s476] sm:$0xff]
        %v843 = vld [vmem:[%s476 + $0x8] sm:$0xff]
        %v844 = vld [vmem:[%s476 + $0x10] sm:$0xff]
        %v845 = vld [vmem:[%s476 + $0x18] sm:$0xff]
        %v846 = vld [vmem:[%s476 + $0x20] sm:$0xff]
        %v847 = vld [vmem:[%s476 + $0x28] sm:$0xff]
        %v848 = vld [vmem:[%s476 + $0x30] sm:$0xff]
        %v849 = vld [vmem:[%s476 + $0x38] sm:$0xff]
        %v850 = vld [vmem:[%s476 + $0x40] sm:$0xff]
        %v851 = vld [vmem:[%s476 + $0x48] sm:$0xff]
        %v852 = vld [vmem:[%s476 + $0x50] sm:$0xff]
        %v853 = vld [vmem:[%s476 + $0x58] sm:$0xff]
        %v854 = vld [vmem:[%s476 + $0x60] sm:$0xff]
        %v855 = vld [vmem:[%s476 + $0x68] sm:$0xff]
        %v856 = vld [vmem:[%s476 + $0x70] sm:$0xff]
        %v857 = vld [vmem:[%s476 + $0x78] sm:$0xff]
        %v859 = vsel %vm740, %v820, 0
        %v862 = vsel %vm740, %v825, 0
        %v865 = vsel %vm740, %v830, 0
        %v868 = vsel %vm740, %v835, 0
        %v871 = vsel %vm740, %v842, 0
        %v874 = vsel %vm740, %v843, 0
        %v877 = vsel %vm740, %v844, 0
        %v880 = vsel %vm740, %v845, 0
        %v883 = vsel %vm740, %v846, 0
        %v886 = vsel %vm740, %v847, 0
        %v889 = vsel %vm740, %v848, 0
        %v892 = vsel %vm740, %v849, 0
        %v895 = vsel %vm740, %v850, 0
        %v898 = vsel %vm740, %v851, 0
        %v901 = vsel %vm740, %v852, 0
        %v904 = vsel %vm740, %v853, 0
        %v907 = vsel %vm740, %v854, 0
        %v910 = vsel %vm740, %v855, 0
        %v913 = vsel %vm740, %v856, 0
        %v916 = vsel %vm740, %v857, 0
        %918 = vmatprep.subr.mxu0 0.0
        %919 = vmatpush1.xpose.msra.mxu0 %v871
        %920 = vmatprep.subr.mxu0 0.0
        %921 = vmatpush1.xpose.msra.mxu0 %v874
        %922 = vmatprep.subr.mxu0 0.0
        %923 = vmatpush1.xpose.msra.mxu0 %v877
        %924 = vmatprep.subr.mxu0 0.0
        %925 = vmatpush1.xpose.msra.mxu0 %v880
        %926 = vmatprep.subr.mxu0 0.0
        %927 = vmatpush1.xpose.msra.mxu0 %v883
        %928 = vmatprep.subr.mxu0 0.0
        %929 = vmatpush1.xpose.msra.mxu0 %v886
        %930 = vmatprep.subr.mxu0 0.0
        %931 = vmatpush1.xpose.msra.mxu0 %v889
        %932 = vmatprep.subr.mxu0 0.0
        %933 = vmatpush1.xpose.msra.mxu0 %v892
        %934 = vmatprep.subr.mxu0 0.0
        %935 = vmatpush1.xpose.msra.mxu0 %v895
        %936 = vmatprep.subr.mxu0 0.0
        %937 = vmatpush1.xpose.msra.mxu0 %v898
        %938 = vmatprep.subr.mxu0 0.0
        %939 = vmatpush1.xpose.msra.mxu0 %v901
        %940 = vmatprep.subr.mxu0 0.0
        %941 = vmatpush1.xpose.msra.mxu0 %v904
        %942 = vmatprep.subr.mxu0 0.0
        %943 = vmatpush1.xpose.msra.mxu0 %v907
        %944 = vmatprep.subr.mxu0 0.0
        %945 = vmatpush1.xpose.msra.mxu0 %v910
        %946 = vmatprep.subr.mxu0 0.0
        %947 = vmatpush1.xpose.msra.mxu0 %v913
        %948 = vmatprep.subr.mxu0 0.0
        %949 = vmatpush1.xpose.msra.mxu0 %v916
        %950 = vmatprep.subr.mxu0 0.0
        %951 = vmatpush1.xpose.msra.mxu0 0.0
        %952 = vmatprep.subr.mxu0 0.0
        %953 = vmatpush1.xpose.msra.mxu0 0.0
        %954 = vmatprep.subr.mxu0 0.0
        %955 = vmatpush1.xpose.msra.mxu0 0.0
        %956 = vmatprep.subr.mxu0 0.0
        %957 = vmatpush1.xpose.msra.mxu0 0.0
        %958 = vmatprep.subr.mxu0 0.0
        %959 = vmatpush1.xpose.msra.mxu0 0.0
        %960 = vmatprep.subr.mxu0 0.0
        %961 = vmatpush1.xpose.msra.mxu0 0.0
        %962 = vmatprep.subr.mxu0 0.0
        %963 = vmatpush1.xpose.msra.mxu0 0.0
        %964 = vmatprep.subr.mxu0 0.0
        %965 = vmatpush1.xpose.msra.mxu0 0.0
        %966 = vmatprep.subr.mxu0 0.0
        %967 = vmatpush1.xpose.msra.mxu0 0.0
        %968 = vmatprep.subr.mxu0 0.0
        %969 = vmatpush1.xpose.msra.mxu0 0.0
        %970 = vmatprep.subr.mxu0 0.0
        %971 = vmatpush1.xpose.msra.mxu0 0.0
        %972 = vmatprep.subr.mxu0 0.0
        %973 = vmatpush1.xpose.msra.mxu0 0.0
        %974 = vmatprep.subr.mxu0 0.0
        %975 = vmatpush1.xpose.msra.mxu0 0.0
        %976 = vmatprep.subr.mxu0 0.0
        %977 = vmatpush1.xpose.msra.mxu0 0.0
        %978 = vmatprep.subr.mxu0 0.0
        %979 = vmatpush1.xpose.msra.mxu0 0.0
        %980 = vmatprep.subr.mxu0 0.0
        %981 = vmatpush1.xpose.msra.mxu0 0.0
        %982 = vmatprep.mubr.f32.mxu0 0.0
        %983 = vmatmul.mubr.f32.gmra.mrb[0].mxu0 %v859
        %v984 = vpop.f32.mrb[0].mxu0
        %v985 = vadd.f32 0.0, %v984
        %v986 = vpop.f32.mrb[0].mxu0
        %987 = vmatprep.mubr.f32.mxu0 0.0
        %988 = vmatmul.mubr.f32.gmra.mrb[0].mxu0 %v862
        %v989 = vpop.f32.mrb[0].mxu0
        %v990 = vadd.f32 0.0, %v989
        %v991 = vpop.f32.mrb[0].mxu0
        %992 = vmatprep.mubr.f32.mxu0 0.0
        %993 = vmatmul.mubr.f32.gmra.mrb[0].mxu0 %v865
        %v994 = vpop.f32.mrb[0].mxu0
        %v995 = vadd.f32 0.0, %v994
        %v996 = vpop.f32.mrb[0].mxu0
        %997 = vmatprep.mubr.f32.mxu0 0.0
        %998 = vmatmul.mubr.f32.gmra.mrb[0].mxu0 %v868
        %v999 = vpop.f32.mrb[0].mxu0
        %v1000 = vadd.f32 0.0, %v999
        %v1001 = vpop.f32.mrb[0].mxu0
        %1002 = vdwg.mxu0
        %v1003 = vlaneseq
        %v1004 = vand.u32 %v1003, 127
        %vm1005 = vcmp.lt.s32.totalorder %v1004, 80
        %v1006 = vsel %vm1005, 1, 0
        %vm1007 = vcmp.eq.s32.totalorder %v1006, 1
        %v1008 = vsel %vm1007, %v985, -1e+30
        %v1009 = vsel %vm1007, %v990, -1e+30
        %v1010 = vsel %vm1007, %v995, -1e+30
        %v1011 = vsel %vm1007, %v1000, -1e+30
        %1012 = vmax.xlane.f32.xlu0 %v1008
        %v1013 = vpop.xlane.xlu0 %1012
        %1014 = vmax.xlane.f32.xlu0 %v1009
        %v1015 = vpop.xlane.xlu0 %1014
        %1016 = vmax.xlane.f32.xlu0 %v1010
        %v1017 = vpop.xlane.xlu0 %1016
        %1018 = vmax.xlane.f32.xlu0 %v1011
        %v1019 = vpop.xlane.xlu0 %1018
        %v1020 = vsub.f32 %v1008, %v1013
        %v1021 = vsub.f32 %v1009, %v1015
        %v1022 = vsub.f32 %v1010, %v1017
        %v1023 = vsub.f32 %v1011, %v1019
        %v1024 = vmul.f32 %v1020, 1.442695
        %v1025 = vpow.pop %v1024
        %v1026 = vmul.f32 %v1021, 1.442695
        %v1027 = vpow.pop %v1026
        %v1028 = vmul.f32 %v1022, 1.442695
        %v1029 = vpow.pop %v1028
        %v1030 = vmul.f32 %v1023, 1.442695
        %v1031 = vpow.pop %v1030
        %1032 = vadd.xlane.f32.xlu0 %v1025
        %v1033 = vpop.xlane.xlu0 %1032
        %1034 = vadd.xlane.f32.xlu0 %v1027
        %v1035 = vpop.xlane.xlu0 %1034
        %1036 = vadd.xlane.f32.xlu0 %v1029
        %v1037 = vpop.xlane.xlu0 %1036
        %1038 = vadd.xlane.f32.xlu0 %v1031
        %v1039 = vpop.xlane.xlu0 %1038
        %v1040 = vlog2.pop %v1033
        %v1041 = vmul.f32 %v1040, 0.6931472
        %v1042 = vlog2.pop %v1035
        %v1043 = vmul.f32 %v1042, 0.6931472
        %v1044 = vlog2.pop %v1037
        %v1045 = vmul.f32 %v1044, 0.6931472
        %v1046 = vlog2.pop %v1039
        %v1047 = vmul.f32 %v1046, 0.6931472
        %v1048 = vadd.f32 %v1013, %v1041
        %v1049 = vadd.f32 %v1015, %v1043
        %v1050 = vadd.f32 %v1017, %v1045
        %v1051 = vadd.f32 %v1019, %v1047
        %v1052 = vld [vmem:[%s457] sm:$0xff]
        %v1053 = vld [vmem:[%s457 + $0x8] sm:$0xff]
        %v1054 = vld [vmem:[%s457 + $0x10] sm:$0xff]
        %v1055 = vld [vmem:[%s457 + $0x18] sm:$0xff]
        %v1056 = vsub.f32 %v1052, %v1048
        %v1057 = vsub.f32 %v1053, %v1049
        %v1058 = vsub.f32 %v1054, %v1050
        %v1059 = vsub.f32 %v1055, %v1051
        %vm1060 = vcmask 7168
        %1061 = vst.msk [vmem:[%s485] sm:$0xff] %vm1060, %v1056
        %1062 = vst.msk [vmem:[%s485 + $0x8] sm:$0xff] %vm1060, %v1057
        %1063 = vst.msk [vmem:[%s485 + $0x10] sm:$0xff] %vm1060, %v1058
        %1064 = vst.msk [vmem:[%s485 + $0x18] sm:$0xff] %vm1060, %v1059
        %v1065 = vlaneseq
        %v1066 = vshrl.u32 %v1065, 7
        %v1067 = vadd.s32 %v1066, 8
        %v1068 = vadd.s32 %v1066, 16
        %v1069 = vadd.s32 %v1066, 24
        %s1070 = smul.u32 %s29, 32
        %v1071 = vstv %s1070
        %v1072 = vadd.s32 %v1066, %v1071
        %v1073 = vadd.s32 %v1067, %v1071
        %v1074 = vadd.s32 %v1068, %v1071
        %v1075 = vadd.s32 %v1069, %v1071
        %vm1076 = vcmp.lt.s32.totalorder %v1072, 40
        %vm1077 = vcmp.lt.s32.totalorder %v1073, 40
        %vm1078 = vcmp.lt.s32.totalorder %v1074, 40
        %vm1079 = vcmp.lt.s32.totalorder %v1075, 40
        %v1080 = vsel %vm1076, 1, 0
        %v1081 = vsel %vm1077, 1, 0
        %v1082 = vsel %vm1078, 1, 0
        %v1083 = vsel %vm1079, 1, 0
        %vm1084 = vcmp.eq.s32.totalorder %v1080, 1
        %vm1085 = vcmp.eq.s32.totalorder %v1081, 1
        %vm1086 = vcmp.eq.s32.totalorder %v1082, 1
        %vm1087 = vcmp.eq.s32.totalorder %v1083, 1
        %v1088 = vsel %vm1084, %v1025, 0.0
        %v1089 = vsel %vm1085, %v1027, 0.0
        %v1090 = vsel %vm1086, %v1029, 0.0
        %v1091 = vsel %vm1087, %v1031, 0.0
        %v1092 = vsel %vm1076, %v1013, -1e+30
        %v1093 = vsel %vm1077, %v1015, -1e+30
        %v1094 = vsel %vm1078, %v1017, -1e+30
        %v1095 = vsel %vm1079, %v1019, -1e+30
        %v1096 = vsel %vm1084, %v1008, -1e+30
        %v1097 = vsel %vm1085, %v1009, -1e+30
        %v1098 = vsel %vm1086, %v1010, -1e+30
        %v1099 = vsel %vm1087, %v1011, -1e+30
        %v1100 = vmax.f32 %v1092, %v1093
        %v1101 = vmax.f32 %v1094, %v1095
        %v1102 = vmax.f32 %v1100, %v1101
        %v1103 = vrot.slane %v1102, 4
        %v1104 = vmax.f32 %v1102, %v1103
        %v1105 = vrot.slane %v1104, 2
        %v1106 = vmax.f32 %v1104, %v1105
        %v1107 = vrot.slane %v1106, 1
        %v1108 = vmax.f32 %v1106, %v1107
        %v1109 = vsub.f32 %v1092, %v1108
        %v1110 = vsub.f32 %v1093, %v1108
        %v1111 = vsub.f32 %v1094, %v1108
        %v1112 = vsub.f32 %v1095, %v1108
        %v1113 = vmul.f32 %v1109, 1.442695
        %v1114 = vpow.pop %v1113
        %v1115 = vmul.f32 %v1110, 1.442695
        %v1116 = vpow.pop %v1115
        %v1117 = vmul.f32 %v1111, 1.442695
        %v1118 = vpow.pop %v1117
        %v1119 = vmul.f32 %v1112, 1.442695
        %v1120 = vpow.pop %v1119
        %v1121 = vmul.f32 %v1088, %v1114
        %v1122 = vmul.f32 %v1089, %v1116
        %v1123 = vmul.f32 %v1090, %v1118
        %v1124 = vmul.f32 %v1091, %v1120
        %v1125 = vadd.f32 %v1121, %v1122
        %v1126 = vadd.f32 %v1125, %v1123
        %v1127 = vadd.f32 %v1126, %v1124
        %v1128 = vrot.slane %v1127, 4
        %v1129 = vadd.f32 %v1127, %v1128
        %v1130 = vrot.slane %v1129, 2
        %v1131 = vadd.f32 %v1129, %v1130
        %v1132 = vrot.slane %v1131, 1
        %v1133 = vadd.f32 %v1131, %v1132
        %v1134 = vmax.f32 %v1096, %v1097
        %v1135 = vmax.f32 %v1098, %v1099
        %v1136 = vmax.f32 %v1134, %v1135
        %v1137 = vrot.slane %v1136, 4
        %v1138 = vmax.f32 %v1136, %v1137
        %v1139 = vrot.slane %v1138, 2
        %v1140 = vmax.f32 %v1138, %v1139
        %v1141 = vrot.slane %v1140, 1
        %v1142 = vmax.f32 %v1140, %v1141
        %v1143 = vld [vmem:[#allocation2] sm:$0x1]
        %v1144 = vmax.f32 %v1143, %v1142
        %v1145 = vld [vmem:[#allocation3] sm:$0x1]
        %v1146 = vsub.f32 %v1143, %v1144
        %v1147 = vmul.f32 %v1146, 1.442695
        %v1148 = vpow.pop %v1147
        %v1149 = vmul.f32 %v1145, %v1148
        %v1150 = vsub.f32 %v1108, %v1144
        %v1151 = vmin.f32 %v1150, 80.0
        %v1152 = vmul.f32 %v1151, 1.442695
        %v1153 = vpow.pop %v1152
        %v1154 = vmul.f32 %v1133, %v1153
        %v1155 = vadd.f32 %v1149, %v1154
        %1156 = vst [vmem:[#allocation3] sm:$0x1] %v1155
        %1157 = vst [vmem:[#allocation2] sm:$0x1] %v1144
        %p1158 = scmp.eq.s32.totalorder %s29, 1
        // Predicated region
        $region49: #{tpu_custom_call.1} parent=43 // pred_check
          %p1159 = pneg %p1158
        $region50: #{tpu_custom_call.1} parent=43 // pred_check_branch
          %1161 = sbr.rel (%p1159) target = $region52
        $region51: #{tpu_custom_call.1} parent=43 // pred_region
          %v1162 = vld [vmem:[#allocation2] sm:$0x1]
          %v1163 = vld [vmem:[#allocation3] sm:$0x1]
          %v1164 = vmax.f32 %v1163, 1e-37
          %v1165 = vlog2.pop %v1164
          %v1166 = vmul.f32 %v1165, 0.6931472
          %v1167 = vadd.f32 %v1162, %v1166
          %v1168 = vld [vmem:[%s461] sm:$0x1]
          %v1169 = vsub.f32 %v1168, %v1167
          %1170 = vst [vmem:[%s433] sm:$0x1] %v1169
        $region52: #{tpu_custom_call.1} parent=43 // pred_fallthru
          _
        %s1171 = smul.u32 4, %s29
        %p1172 = scmp.lt.s32.totalorder %s28, 1
        %s1173 = scalar_select %p1172, %s28, 1
        %p1174 = scmp.lt.s32.totalorder %s1171, 7
        %s1175 = scalar_select %p1174, %s1171, 7
        %s1176 = smul.addr %s1173, 8
        %s1177 = sadd.s32 %s1175, %s1176
        %s1178 = smul.addr %s1177, 8
        %s1179 = scalar_lea.vmem %s6, %s1178
        %p1180 = scmp.lt.s32.totalorder %s28, 1
        %s1181 = scalar_select %p1180, %s28, 1
        %s1182 = smul.addr %s1181, 16
        %s1183 = smul.addr %s1182, 8
        %s1184 = scalar_lea.vmem %s7, %s1183
        %s1185 = smul.u32 4, %s29
        %p1186 = scmp.lt.s32.totalorder %s28, 1
        %s1187 = scalar_select %p1186, %s28, 1
        %p1188 = scmp.lt.s32.totalorder %s1185, 7
        %s1189 = scalar_select %p1188, %s1185, 7
        %s1190 = smul.addr %s1187, 8
        %s1191 = sadd.s32 %s1189, %s1190
        %s1192 = smul.addr %s1191, 8
        %s1193 = scalar_lea.vmem %s8, %s1192
        %s1194 = sand.u32 %s276, 1
        %s1195 = scalar_lea.sflag [#allocation5], %s1194
        %s1196 = sand.u32 %s276, 1
        %s1197 = scalar_lea.vmem [#allocation4], %s1196
        // Predicated region
        $region53: #{tpu_custom_call.1} parent=43 // pred_check
          %p1198 = pneg %p206
        $region54: #{tpu_custom_call.1} parent=43 // pred_check_branch
          %1200 = sbr.rel (%p1198) target = $region56
        $region55: #{tpu_custom_call.1} parent=43 // pred_region
          %s1201 = smul.u32 4, %s29
        $region56: #{tpu_custom_call.1} parent=43 // pred_fallthru
          _
        // Predicated region
        $region57: #{tpu_custom_call.1} parent=43 // pred_check
          %p1202 = pneg %p232
        $region58: #{tpu_custom_call.1} parent=43 // pred_check_branch
          %1204 = sbr.rel (%p1202) target = $region60
        $region59: #{tpu_custom_call.1} parent=43 // pred_region
          _
        $region60: #{tpu_custom_call.1} parent=43 // pred_fallthru
          _
        // Predicated region
        $region61: #{tpu_custom_call.1} parent=43 // pred_check
          %p1205 = pneg %p260
        $region62: #{tpu_custom_call.1} parent=43 // pred_check_branch
          %1207 = sbr.rel (%p1205) target = $region64
        $region63: #{tpu_custom_call.1} parent=43 // pred_region
          %s1208 = smul.u32 4, %s29
        $region64: #{tpu_custom_call.1} parent=43 // pred_fallthru
          _
        // Predicated region
        $region65: #{tpu_custom_call.1} parent=43 // pred_check
          %p1209 = pneg %p286
        $region66: #{tpu_custom_call.1} parent=43 // pred_check_branch
          %1211 = sbr.rel (%p1209) target = $region68
        $region67: #{tpu_custom_call.1} parent=43 // pred_region
          %s1213 = ssub.s32 16, 16
          %1214 = vsyncadd %s1195, %s1213
          %s1215 = smul.addr %s28, 16
          %s1216 = scalar_lea.hbm %s9, %s1215
          %s1218 = sshll.u32 %s1197, 4
          %s1219 = int_to_ptr.vmem [resolvable:$true] %s1218
          %1221 = dma.vmem_to_hbm [thread:$0]  %s1219, 16, %s1216, %s1195
        $region68: #{tpu_custom_call.1} parent=43 // pred_fallthru
          _
      $region44: #{tpu_custom_call.1} parent=5 // pred_fallthru
        _
      %p1222 = scmp.le.s32.totalorder 2, %s19
      // Predicated region
      $region69: #{tpu_custom_call.1} parent=5 // pred_check
        %p1223 = pneg %p1222
      $region70: #{tpu_custom_call.1} parent=5 // pred_check_branch
        %1225 = sbr.rel (%p1223) target = $region72
      $region71: #{tpu_custom_call.1} parent=5 // pred_region
        %s1226 = ssub.s32 %s19, 2
        // Predicated region
        $region73: #{tpu_custom_call.1} parent=71 // pred_check
          %p1227 = pneg %p212
        $region74: #{tpu_custom_call.1} parent=71 // pred_check_branch
          %1229 = sbr.rel (%p1227) target = $region76
        $region75: #{tpu_custom_call.1} parent=71 // pred_region
          %s1230 = smul.u32 4, %s31
          %p1231 = scmp.lt.s32.totalorder %s30, 1
          %s1232 = scalar_select %p1231, %s30, 1
          %p1233 = scmp.lt.s32.totalorder %s1230, 7
          %s1234 = scalar_select %p1233, %s1230, 7
          %s1235 = smul.addr %s1232, 8
          %s1236 = sadd.s32 %s1234, %s1235
          %s1237 = smul.addr %s1236, 8
          %s1238 = scalar_lea.vmem %s6, %s1237
        $region76: #{tpu_custom_call.1} parent=71 // pred_fallthru
          _
        // Predicated region
        $region77: #{tpu_custom_call.1} parent=71 // pred_check
          %p1239 = pneg %p238
        $region78: #{tpu_custom_call.1} parent=71 // pred_check_branch
          %1241 = sbr.rel (%p1239) target = $region80
        $region79: #{tpu_custom_call.1} parent=71 // pred_region
          %p1242 = scmp.lt.s32.totalorder %s30, 1
          %s1243 = scalar_select %p1242, %s30, 1
          %s1244 = smul.addr %s1243, 16
          %s1245 = smul.addr %s1244, 8
          %s1246 = scalar_lea.vmem %s7, %s1245
        $region80: #{tpu_custom_call.1} parent=71 // pred_fallthru
          _
        // Predicated region
        $region81: #{tpu_custom_call.1} parent=71 // pred_check
          %p1247 = pneg %p266
        $region82: #{tpu_custom_call.1} parent=71 // pred_check_branch
          %1249 = sbr.rel (%p1247) target = $region84
        $region83: #{tpu_custom_call.1} parent=71 // pred_region
          %s1250 = smul.u32 4, %s31
          %p1251 = scmp.lt.s32.totalorder %s30, 1
          %s1252 = scalar_select %p1251, %s30, 1
          %p1253 = scmp.lt.s32.totalorder %s1250, 7
          %s1254 = scalar_select %p1253, %s1250, 7
          %s1255 = smul.addr %s1252, 8
          %s1256 = sadd.s32 %s1254, %s1255
          %s1257 = smul.addr %s1256, 8
          %s1258 = scalar_lea.vmem %s8, %s1257
        $region84: #{tpu_custom_call.1} parent=71 // pred_fallthru
          _
        // Predicated region
        $region85: #{tpu_custom_call.1} parent=71 // pred_check
          %p1259 = pneg %p292
        $region86: #{tpu_custom_call.1} parent=71 // pred_check_branch
          %1261 = sbr.rel (%p1259) target = $region88
        $region87: #{tpu_custom_call.1} parent=71 // pred_region
          %s1262 = sand.u32 %s277, 1
          %s1263 = scalar_lea.sflag [#allocation5], %s1262
          %s1264 = sand.u32 %s277, 1
          %s1265 = scalar_lea.vmem [#allocation4], %s1264
          %1266 = dma.done %s1263, 16
        $region88: #{tpu_custom_call.1} parent=71 // pred_fallthru
          _
      $region72: #{tpu_custom_call.1} parent=5 // pred_fallthru
        _
    $region6: #{tpu_custom_call.1} parent=1 // loop_footer
      %s23 = sadd.s32 1, %s19
    $region7: #{tpu_custom_call.1} parent=1 // loop_footer_branch
      %18 = sbr.rel target = $region3
    $region8: #{tpu_custom_call.1} parent=1 // loop_exit
      _
    %1267 = vsyncpa [#allocation5], 1
    %s1268 = scalar_lea.sflag [#allocation5], 1
    %1269 = vsyncpa %s1268, 1

</llo_original>
